<compile_context>
chip_gen: v7x
topology: tpu7x:2x2x1
jax: 0.10.0
libtpu: 0.0.40
codegen_flags: <defaults>
</compile_context>

<pallas_src>
import jax
import jax.numpy as jnp
from jax import lax
from jax.experimental import pallas as pl
from jax.experimental.pallas import tpu as pltpu


def _round_up(x, m):
    return ((x + m - 1) // m) * m


# ---------------------------------------------------------------------------
# Fused kernel: attention + expert mixing + im2col + single matmul per sample.
# ---------------------------------------------------------------------------
def _make_cond_conv_kernel(*, b_tile, cin, cout, h, w, wp, kh, kw, K, pad,
                           n_cols, flat_len, compute_dtype, precision):
    n_taps = kh * kw
    ck = cin * n_taps                      # folded contraction depth
    row0 = pad * wp + pad                  # flat offset of x[., 0, 0] in the padded buffer
    inv_hw = 1.0 / float(h * w)
    f32 = jnp.float32
    is_f32 = jnp.dtype(compute_dtype) == jnp.dtype(jnp.float32)

    def kernel(x_ref, attw_ref, w_ref, b_ref, out_ref, xflat_ref, xcol_ref):
        # x_ref:    (b_tile, cin, h*w)     activations (compute_dtype)
        # attw_ref: (cin, K)               attention 1x1-conv weight (f32, resident)
        # w_ref:    (K, cout, ck)          expert conv weights, tap-major flattened
        # b_ref:    (cout, K)              expert biases (f32, resident)
        # out_ref:  (b_tile, cout, n_cols) lane-dense channel-major output block
        # xflat_ref:(cin, flat_len)        zero-padded flattened input (scratch)
        # xcol_ref: (ck, n_cols)           im2col slab (scratch)

        # Pad positions (and the extra bottom rows) are never overwritten, so one
        # zero-fill per grid step keeps the padding valid for every sample.
        xflat_ref[...] = jnp.zeros_like(xflat_ref)

        for b in range(b_tile):            # b_tile is small (<= 8): static unroll
            # ---- attention: adaptive-avg-pool -> 1x1 conv (no bias) -> sigmoid
            xs = x_ref[b]                                                       # (cin, h*w)
            pooled = jnp.sum(xs.astype(f32), axis=1, keepdims=True) * inv_hw    # (cin, 1)
            logits = jnp.sum(pooled * attw_ref[...], axis=0, keepdims=True)     # (1, K)
            att = jax.nn.sigmoid(logits)                                         # (1, K)
            a = [att[0:1, k:k + 1] for k in range(K)]   # K (1,1) mixing coefficients

            # ---- expert mixing on the VPU, f32 accumulation (no K-deep MXU pass,
            #      aggregated weight never exists in HBM)
            wmix = a[0] * w_ref[0].astype(f32)
            for k in range(1, K):
                wmix = wmix + a[k] * w_ref[k].astype(f32)                        # (cout, ck)
            bias = a[0] * b_ref[:, 0:1]
            for k in range(1, K):
                bias = bias + a[k] * b_ref[:, k:k + 1]                           # (cout, 1)

            # ---- fused im2col, entirely in VMEM --------------------------------
            # Scatter the h valid rows of this sample into the zero-padded,
            # flattened buffer (replaces the wrapper-side jnp.pad HBM copy).
            for r in range(h):
                xflat_ref[:, pl.ds(row0 + r * wp, w)] = x_ref[b, :, pl.ds(r * w, w)]
            # Each tap is a shifted window of the flattened padded buffer.  The
            # junk columns (x >= w of each output row, plus the 128-lane round-up)
            # are sliced off by the wrapper.
            for t in range(n_taps):
                dy, dx = divmod(t, kw)
                xcol_ref[pl.ds(t * cin, cin), :] = xflat_ref[:, pl.ds(dy * wp + dx, n_cols)]

            # ---- ONE MXU matmul per sample, f32 accumulation -------------------
            if is_f32:
                acc = jnp.dot(wmix, xcol_ref[...],
                              preferred_element_type=f32, precision=precision)
            else:
                acc = jnp.dot(wmix.astype(compute_dtype), xcol_ref[...],
                              preferred_element_type=f32)
            out_ref[b] = (acc + bias).astype(out_ref.dtype)

    return kernel


# ---------------------------------------------------------------------------
# Wrapper.
# ---------------------------------------------------------------------------
def cond_conv_forward(params, x, *, kernel_size, padding, stride=1, dilation=1,
                      groups=1, compute_dtype=jnp.bfloat16,
                      precision=lax.Precision.DEFAULT, b_tile=None,
                      vmem_limit_bytes=48 * 1024 * 1024):
    # TODO(synk): only stride=1 / dilation=1 / groups=1 is implemented; the torch
    # module's final .view(bs, Cout, h, w) already forces output spatial ==
    # input spatial (i.e. 2*padding == kernel_size - 1) for this configuration.
    assert stride == 1 and dilation == 1 and groups == 1
    compute_dtype = jnp.dtype(compute_dtype)

    bs, cin, h, w = x.shape
    weight = params["weight"]                              # (K, Cout, Cin, kh, kw)
    K, cout, _, kh, kw = weight.shape
    assert kh == kernel_size and kw == kernel_size
    assert 2 * padding == kernel_size - 1, "output spatial must equal input spatial"

    # ---- geometry of the flattened, padded activation buffer ----------------
    wp = w + 2 * padding                                   # padded row width
    hp = h + 2 * padding
    n_cols = _round_up(h * wp, 128)                        # lane-dense output width
    s_max = (kh - 1) * wp + (kw - 1)                       # largest tap shift
    rows_ext = max(hp, -(-(s_max + n_cols) // wp))         # keep every window in bounds
    flat_len = rows_ext * wp
    ck = cin * kh * kw

    # ---- one-time reorders / casts of the small constant parameters ---------
    # (in a real network the weights are cast once at init and the activations
    #  already arrive in the compute dtype from the producing layer)
    attw_t = params["att_weight"].reshape(K, cin).T.astype(jnp.float32)        # (Cin, K)
    # tap-major flattened experts: w_flat[k, co, (dy*kw+dx)*cin + c] == weight[k, co, c, dy, dx]
    w_flat = jnp.transpose(weight, (0, 1, 3, 4, 2)).reshape(K, cout, ck).astype(compute_dtype)
    bias_t = params["bias"].T.astype(jnp.float32)                              # (Cout, K)
    x2d = x.reshape(bs, cin, h * w).astype(compute_dtype)                      # metadata reshape

    # ---- pick B_TILE (samples per grid step) against a VMEM budget ----------
    if b_tile is None:
        cd = compute_dtype.itemsize
        od = jnp.dtype(x.dtype).itemsize
        per_sample = 2 * (cin * h * w * cd + cout * n_cols * od)     # double-buffered blocks
        fixed = 2 * (w_flat.size * cd + attw_t.size * 4 + bias_t.size * 4)     # resident params
        fixed += (cin * flat_len + ck * n_cols) * cd                           # scratch
        budget = 16 * 1024 * 1024          # conservative for v5e/v6e (128 MiB) and v7x (64 MiB)
        b_tile = 1
        for cand in range(1, min(bs, 8) + 1):
            if bs % cand:
                continue
            if bs // cand < min(2, bs):    # keep >= 2 grid steps so both v7x TCs get work
                continue
            if fixed + per_sample * cand > budget:
                continue
            b_tile = cand
    assert bs % b_tile == 0
    grid = (bs // b_tile,)

    kernel = _make_cond_conv_kernel(
        b_tile=b_tile, cin=cin, cout=cout, h=h, w=w, wp=wp, kh=kh, kw=kw, K=K,
        pad=padding, n_cols=n_cols, flat_len=flat_len,
        compute_dtype=compute_dtype, precision=precision)

    flops = bs * (2 * cout * ck * n_cols + 2 * K * cout * ck)
    bytes_accessed = int(x2d.size * compute_dtype.itemsize
                         + w_flat.size * compute_dtype.itemsize
                         + attw_t.size * 4 + bias_t.size * 4
                         + bs * cout * n_cols * jnp.dtype(x.dtype).itemsize)

    out_p = pl.pallas_call(
        kernel,
        out_shape=jax.ShapeDtypeStruct((bs, cout, n_cols), x.dtype),
        grid_spec=pltpu.PrefetchScalarGridSpec(
            num_scalar_prefetch=0,
            grid=grid,
            in_specs=[
                pl.BlockSpec((b_tile, cin, h * w), lambda i: (i, 0, 0)),   # activations
                pl.BlockSpec((cin, K), lambda i: (0, 0)),                  # attention weight
                pl.BlockSpec((K, cout, ck), lambda i: (0, 0, 0)),          # expert weights
                pl.BlockSpec((cout, K), lambda i: (0, 0)),                 # expert biases
            ],
            out_specs=pl.BlockSpec((b_tile, cout, n_cols), lambda i: (i, 0, 0)),
            scratch_shapes=[
                pltpu.VMEM((cin, flat_len), compute_dtype),   # zero-padded flat input
                pltpu.VMEM((ck, n_cols), compute_dtype),      # im2col slab
            ],
        ),
        compiler_params=pltpu.CompilerParams(
            dimension_semantics=("parallel",),
            # <= v7x's 64 MiB with headroom; can be raised towards ~100 MiB on
            # v5e/v6e to enable a larger b_tile at production shapes.
            vmem_limit_bytes=vmem_limit_bytes),
        cost_estimate=pl.CostEstimate(flops=flops, transcendentals=bs * K,
                                      bytes_accessed=bytes_accessed),
    )(x2d, attw_t, w_flat, bias_t)

    # Output is channel-major over the flattened padded rows: keep the h*wp valid
    # columns, reinterpret as (h, wp), drop the width padding.
    return out_p[:, :, :h * wp].reshape(bs, cout, h, wp)[:, :, :, :w]


# ---------------------------------------------------------------------------
# Pure-JAX reference (mirrors the PyTorch forward) for the correctness check.
# ---------------------------------------------------------------------------
def cond_conv_reference(params, x, *, kernel_size, padding):
    bs, cin, h, w = x.shape
    weight = params["weight"]
    pooled = x.mean(axis=(2, 3))
    att = jax.nn.sigmoid(jnp.dot(pooled, params["att_weight"].reshape(-1, cin).T,
                                 precision=lax.Precision.HIGHEST))
    agg_w = jnp.einsum("bk,koihw->boihw", att, weight, precision=lax.Precision.HIGHEST)
    agg_b = jnp.dot(att, params["bias"], precision=lax.Precision.HIGHEST)
    outs = []
    for i in range(bs):
        o = lax.conv_general_dilated(
            x[i:i + 1], agg_w[i], window_strides=(1, 1),
            padding=[(padding, padding)] * 2,
            dimension_numbers=("NCHW", "OIHW", "NCHW"),
            precision=lax.Precision.HIGHEST)
        outs.append(o[0] + agg_b[i][:, None, None])
    return jnp.stack(outs, axis=0)


if __name__ == "__main__":
    in_planes, out_planes, ksz, K = 4, 8, 3, 4
    bs, h, w = 4, 16, 16
    padding = 1

    key = jax.random.PRNGKey(0)
    k1, k2, k3, k4 = jax.random.split(key, 4)

    # Attention 1x1 conv weight: kaiming_normal(fan_out, relu) -> std = sqrt(2 / K)
    att_weight = jax.random.normal(k1, (K, in_planes, 1, 1), jnp.float32) * jnp.sqrt(2.0 / K)
    # Expert conv weights: kaiming_uniform -> bound = sqrt(6 / fan_in)
    fan_in = in_planes * ksz * ksz
    bound = float(jnp.sqrt(6.0 / fan_in))
    weight = jax.random.uniform(k2, (K, out_planes, in_planes, ksz, ksz),
                                jnp.float32, -bound, bound)
    # Expert biases: torch.randn(K, out_planes)
    bias = jax.random.normal(k3, (K, out_planes), jnp.float32)
    params = {"att_weight": att_weight, "weight": weight, "bias": bias}

    x = jax.random.normal(k4, (bs, in_planes, h, w), jnp.float32)

    ref = cond_conv_reference(params, x, kernel_size=ksz, padding=padding)

    # Default / performance path: bf16 MXU inputs with f32 accumulation.
    out = jax.block_until_ready(
        cond_conv_forward(params, x, kernel_size=ksz, padding=padding))
    assert out.shape == (bs, out_planes, h, w)
    scale = float(jnp.max(jnp.abs(ref)))
    err = float(jnp.max(jnp.abs(out - ref)))
    assert err <= 2e-2 * scale + 1e-3, f"bf16 path: max abs err {err} (scale {scale})"

    # Strict validation path: f32 inputs, HIGHEST-precision MXU (same kernel code).
    out32 = jax.block_until_ready(
        cond_conv_forward(params, x, kernel_size=ksz, padding=padding,
                          compute_dtype=jnp.float32,
                          precision=lax.Precision.HIGHEST))
    err32 = float(jnp.max(jnp.abs(out32 - ref)))
    assert jnp.allclose(out32, ref, rtol=1e-3, atol=1e-3), f"f32 path: max abs err {err32}"

    print("KERNEL_OK")
</pallas_src>

<mosaic_0001>
module attributes {stable_mosaic.version = 11 : i64} {
  func.func @kernel(%arg0: i32, %arg1: memref<2x4x256xbf16, #tpu.memory_space<vmem>>, %arg2: memref<4x4xf32, #tpu.memory_space<vmem>>, %arg3: memref<4x8x36xbf16, #tpu.memory_space<vmem>>, %arg4: memref<8x4xf32, #tpu.memory_space<vmem>>, %arg5: memref<2x8x384xf32, #tpu.memory_space<vmem>>, %arg6: memref<4x432xbf16, #tpu.memory_space<vmem>>, %arg7: memref<36x384xbf16, #tpu.memory_space<vmem>>) attributes {dimension_semantics = [#tpu.dimension_semantics<parallel>], iteration_bounds = array<i64: 2>, scalar_prefetch = 0 : i64, scratch_operands = 2 : i64, tpu.core_type = #tpu.core_type<tc>, window_params = [{transform_indices = @transform_0, window_bounds = array<i64: 2, 4, 256>}, {pipeline_mode = #tpu.pipeline_mode<synchronous>, transform_indices = @transform_1, window_bounds = array<i64: 4, 4>}, {pipeline_mode = #tpu.pipeline_mode<synchronous>, transform_indices = @transform_2, window_bounds = array<i64: 4, 8, 36>}, {pipeline_mode = #tpu.pipeline_mode<synchronous>, transform_indices = @transform_3, window_bounds = array<i64: 8, 4>}, {transform_indices = @transform_4, window_bounds = array<i64: 2, 8, 384>}]} {
    %cst = arith.constant 0.000000e+00 : bf16
    %0 = vector.broadcast %cst : bf16 to vector<4x432xbf16>
    %c0 = arith.constant 0 : index
    %c0_0 = arith.constant 0 : index
    %1 = vector.load %arg6[%c0, %c0_0] : memref<4x432xbf16, #tpu.memory_space<vmem>>, vector<4x432xbf16>
    tpu.vector_store %arg6[%c0, %c0_0], %0 {strides = array<i32>} : memref<4x432xbf16, #tpu.memory_space<vmem>>, vector<4x432xbf16>,
    %c0_1 = arith.constant 0 : index
    %c0_2 = arith.constant 0 : index
    %c0_3 = arith.constant 0 : index
    %2 = vector.load %arg1[%c0_1, %c0_2, %c0_3] : memref<2x4x256xbf16, #tpu.memory_space<vmem>>, vector<1x4x256xbf16>
    %3 = vector.shape_cast %2 : vector<1x4x256xbf16> to vector<4x256xbf16>
    %4 = arith.extf %3 : vector<4x256xbf16> to vector<4x256xf32>
    %cst_4 = arith.constant dense<0.000000e+00> : vector<4xf32>
    %5 = vector.multi_reduction <add>, %4, %cst_4 [1] : vector<4x256xf32> to vector<4xf32>
    %6 = vector.shape_cast %5 : vector<4xf32> to vector<4x1xf32>
    %cst_5 = arith.constant 3.906250e-03 : f32
    %7 = vector.broadcast %cst_5 : f32 to vector<4x1xf32>
    %8 = arith.mulf %6, %7 : vector<4x1xf32>
    %c0_6 = arith.constant 0 : index
    %c0_7 = arith.constant 0 : index
    %9 = vector.load %arg2[%c0_6, %c0_7] : memref<4x4xf32, #tpu.memory_space<vmem>>, vector<4x4xf32>
    %10 = vector.broadcast %8 : vector<4x1xf32> to vector<4x4xf32>
    %11 = arith.mulf %10, %9 : vector<4x4xf32>
    %cst_8 = arith.constant dense<0.000000e+00> : vector<4xf32>
    %12 = vector.multi_reduction <add>, %11, %cst_8 [0] : vector<4x4xf32> to vector<4xf32>
    %13 = vector.shape_cast %12 : vector<4xf32> to vector<1x4xf32>
    %14 = arith.negf %13 : vector<1x4xf32>
    %15 = math.exp %14 : vector<1x4xf32>
    %cst_9 = arith.constant 1.000000e+00 : f32
    %16 = vector.broadcast %cst_9 : f32 to vector<1x4xf32>
    %17 = arith.addf %16, %15 : vector<1x4xf32>
    %18 = arith.divf %16, %17 : vector<1x4xf32>
    %19 = vector.extract_strided_slice %18 {offsets = [0, 0], sizes = [1, 1], strides = [1, 1]} : vector<1x4xf32> to vector<1x1xf32>
    %20 = vector.extract_strided_slice %18 {offsets = [0, 1], sizes = [1, 1], strides = [1, 1]} : vector<1x4xf32> to vector<1x1xf32>
    %21 = vector.extract_strided_slice %18 {offsets = [0, 2], sizes = [1, 1], strides = [1, 1]} : vector<1x4xf32> to vector<1x1xf32>
    %22 = vector.extract_strided_slice %18 {offsets = [0, 3], sizes = [1, 1], strides = [1, 1]} : vector<1x4xf32> to vector<1x1xf32>
    %c0_10 = arith.constant 0 : index
    %c0_11 = arith.constant 0 : index
    %c0_12 = arith.constant 0 : index
    %23 = vector.load %arg3[%c0_10, %c0_11, %c0_12] : memref<4x8x36xbf16, #tpu.memory_space<vmem>>, vector<1x8x36xbf16>
    %24 = vector.shape_cast %23 : vector<1x8x36xbf16> to vector<8x36xbf16>
    %25 = arith.extf %24 : vector<8x36xbf16> to vector<8x36xf32>
    %26 = vector.broadcast %19 : vector<1x1xf32> to vector<8x36xf32>
    %27 = arith.mulf %26, %25 : vector<8x36xf32>
    %c1 = arith.constant 1 : index
    %c0_13 = arith.constant 0 : index
    %c0_14 = arith.constant 0 : index
    %28 = vector.load %arg3[%c1, %c0_13, %c0_14] : memref<4x8x36xbf16, #tpu.memory_space<vmem>>, vector<1x8x36xbf16>
    %29 = vector.shape_cast %28 : vector<1x8x36xbf16> to vector<8x36xbf16>
    %30 = arith.extf %29 : vector<8x36xbf16> to vector<8x36xf32>
    %31 = vector.broadcast %20 : vector<1x1xf32> to vector<8x36xf32>
    %32 = arith.mulf %31, %30 : vector<8x36xf32>
    %33 = arith.addf %27, %32 : vector<8x36xf32>
    %c2 = arith.constant 2 : index
    %c0_15 = arith.constant 0 : index
    %c0_16 = arith.constant 0 : index
    %34 = vector.load %arg3[%c2, %c0_15, %c0_16] : memref<4x8x36xbf16, #tpu.memory_space<vmem>>, vector<1x8x36xbf16>
    %35 = vector.shape_cast %34 : vector<1x8x36xbf16> to vector<8x36xbf16>
    %36 = arith.extf %35 : vector<8x36xbf16> to vector<8x36xf32>
    %37 = vector.broadcast %21 : vector<1x1xf32> to vector<8x36xf32>
    %38 = arith.mulf %37, %36 : vector<8x36xf32>
    %39 = arith.addf %33, %38 : vector<8x36xf32>
    %c3 = arith.constant 3 : index
    %c0_17 = arith.constant 0 : index
    %c0_18 = arith.constant 0 : index
    %40 = vector.load %arg3[%c3, %c0_17, %c0_18] : memref<4x8x36xbf16, #tpu.memory_space<vmem>>, vector<1x8x36xbf16>
    %41 = vector.shape_cast %40 : vector<1x8x36xbf16> to vector<8x36xbf16>
    %42 = arith.extf %41 : vector<8x36xbf16> to vector<8x36xf32>
    %43 = vector.broadcast %22 : vector<1x1xf32> to vector<8x36xf32>
    %44 = arith.mulf %43, %42 : vector<8x36xf32>
    %45 = arith.addf %39, %44 : vector<8x36xf32>
    %c0_19 = arith.constant 0 : index
    %c0_20 = arith.constant 0 : index
    %46 = vector.load %arg4[%c0_19, %c0_20] : memref<8x4xf32, #tpu.memory_space<vmem>>, vector<8x1xf32>
    %47 = vector.broadcast %19 : vector<1x1xf32> to vector<8x1xf32>
    %48 = arith.mulf %47, %46 : vector<8x1xf32>
    %c0_21 = arith.constant 0 : index
    %c1_22 = arith.constant 1 : index
    %49 = vector.load %arg4[%c0_21, %c1_22] : memref<8x4xf32, #tpu.memory_space<vmem>>, vector<8x1xf32>
    %50 = vector.broadcast %20 : vector<1x1xf32> to vector<8x1xf32>
    %51 = arith.mulf %50, %49 : vector<8x1xf32>
    %52 = arith.addf %48, %51 : vector<8x1xf32>
    %c0_23 = arith.constant 0 : index
    %c2_24 = arith.constant 2 : index
    %53 = vector.load %arg4[%c0_23, %c2_24] : memref<8x4xf32, #tpu.memory_space<vmem>>, vector<8x1xf32>
    %54 = vector.broadcast %21 : vector<1x1xf32> to vector<8x1xf32>
    %55 = arith.mulf %54, %53 : vector<8x1xf32>
    %56 = arith.addf %52, %55 : vector<8x1xf32>
    %c0_25 = arith.constant 0 : index
    %c3_26 = arith.constant 3 : index
    %57 = vector.load %arg4[%c0_25, %c3_26] : memref<8x4xf32, #tpu.memory_space<vmem>>, vector<8x1xf32>
    %58 = vector.broadcast %22 : vector<1x1xf32> to vector<8x1xf32>
    %59 = arith.mulf %58, %57 : vector<8x1xf32>
    %60 = arith.addf %56, %59 : vector<8x1xf32>
    %c0_27 = arith.constant 0 : index
    %c0_28 = arith.constant 0 : index
    %c0_29 = arith.constant 0 : index
    %61 = vector.load %arg1[%c0_27, %c0_28, %c0_29] : memref<2x4x256xbf16, #tpu.memory_space<vmem>>, vector<1x4x16xbf16>
    %62 = vector.shape_cast %61 : vector<1x4x16xbf16> to vector<4x16xbf16>
    %c0_30 = arith.constant 0 : index
    %c19 = arith.constant 19 : index
    %63 = vector.load %arg6[%c0_30, %c19] : memref<4x432xbf16, #tpu.memory_space<vmem>>, vector<4x16xbf16>
    tpu.vector_store %arg6[%c0_30, %c19], %62 {strides = array<i32>} : memref<4x432xbf16, #tpu.memory_space<vmem>>, vector<4x16xbf16>,
    %c0_31 = arith.constant 0 : index
    %c0_32 = arith.constant 0 : index
    %c16 = arith.constant 16 : index
    %64 = vector.load %arg1[%c0_31, %c0_32, %c16] : memref<2x4x256xbf16, #tpu.memory_space<vmem>>, vector<1x4x16xbf16>
    %65 = vector.shape_cast %64 : vector<1x4x16xbf16> to vector<4x16xbf16>
    %c0_33 = arith.constant 0 : index
    %c37 = arith.constant 37 : index
    %66 = vector.load %arg6[%c0_33, %c37] : memref<4x432xbf16, #tpu.memory_space<vmem>>, vector<4x16xbf16>
    tpu.vector_store %arg6[%c0_33, %c37], %65 {strides = array<i32>} : memref<4x432xbf16, #tpu.memory_space<vmem>>, vector<4x16xbf16>,
    %c0_34 = arith.constant 0 : index
    %c0_35 = arith.constant 0 : index
    %c32 = arith.constant 32 : index
    %67 = vector.load %arg1[%c0_34, %c0_35, %c32] : memref<2x4x256xbf16, #tpu.memory_space<vmem>>, vector<1x4x16xbf16>
    %68 = vector.shape_cast %67 : vector<1x4x16xbf16> to vector<4x16xbf16>
    %c0_36 = arith.constant 0 : index
    %c55 = arith.constant 55 : index
    %69 = vector.load %arg6[%c0_36, %c55] : memref<4x432xbf16, #tpu.memory_space<vmem>>, vector<4x16xbf16>
    tpu.vector_store %arg6[%c0_36, %c55], %68 {strides = array<i32>} : memref<4x432xbf16, #tpu.memory_space<vmem>>, vector<4x16xbf16>,
    %c0_37 = arith.constant 0 : index
    %c0_38 = arith.constant 0 : index
    %c48 = arith.constant 48 : index
    %70 = vector.load %arg1[%c0_37, %c0_38, %c48] : memref<2x4x256xbf16, #tpu.memory_space<vmem>>, vector<1x4x16xbf16>
    %71 = vector.shape_cast %70 : vector<1x4x16xbf16> to vector<4x16xbf16>
    %c0_39 = arith.constant 0 : index
    %c73 = arith.constant 73 : index
    %72 = vector.load %arg6[%c0_39, %c73] : memref<4x432xbf16, #tpu.memory_space<vmem>>, vector<4x16xbf16>
    tpu.vector_store %arg6[%c0_39, %c73], %71 {strides = array<i32>} : memref<4x432xbf16, #tpu.memory_space<vmem>>, vector<4x16xbf16>,
    %c0_40 = arith.constant 0 : index
    %c0_41 = arith.constant 0 : index
    %c64 = arith.constant 64 : index
    %73 = vector.load %arg1[%c0_40, %c0_41, %c64] : memref<2x4x256xbf16, #tpu.memory_space<vmem>>, vector<1x4x16xbf16>
    %74 = vector.shape_cast %73 : vector<1x4x16xbf16> to vector<4x16xbf16>
    %c0_42 = arith.constant 0 : index
    %c91 = arith.constant 91 : index
    %75 = vector.load %arg6[%c0_42, %c91] : memref<4x432xbf16, #tpu.memory_space<vmem>>, vector<4x16xbf16>
    tpu.vector_store %arg6[%c0_42, %c91], %74 {strides = array<i32>} : memref<4x432xbf16, #tpu.memory_space<vmem>>, vector<4x16xbf16>,
    %c0_43 = arith.constant 0 : index
    %c0_44 = arith.constant 0 : index
    %c80 = arith.constant 80 : index
    %76 = vector.load %arg1[%c0_43, %c0_44, %c80] : memref<2x4x256xbf16, #tpu.memory_space<vmem>>, vector<1x4x16xbf16>
    %77 = vector.shape_cast %76 : vector<1x4x16xbf16> to vector<4x16xbf16>
    %c0_45 = arith.constant 0 : index
    %c109 = arith.constant 109 : index
    %78 = vector.load %arg6[%c0_45, %c109] : memref<4x432xbf16, #tpu.memory_space<vmem>>, vector<4x16xbf16>
    tpu.vector_store %arg6[%c0_45, %c109], %77 {strides = array<i32>} : memref<4x432xbf16, #tpu.memory_space<vmem>>, vector<4x16xbf16>,
    %c0_46 = arith.constant 0 : index
    %c0_47 = arith.constant 0 : index
    %c96 = arith.constant 96 : index
    %79 = vector.load %arg1[%c0_46, %c0_47, %c96] : memref<2x4x256xbf16, #tpu.memory_space<vmem>>, vector<1x4x16xbf16>
    %80 = vector.shape_cast %79 : vector<1x4x16xbf16> to vector<4x16xbf16>
    %c0_48 = arith.constant 0 : index
    %c127 = arith.constant 127 : index
    %81 = vector.load %arg6[%c0_48, %c127] : memref<4x432xbf16, #tpu.memory_space<vmem>>, vector<4x16xbf16>
    tpu.vector_store %arg6[%c0_48, %c127], %80 {strides = array<i32>} : memref<4x432xbf16, #tpu.memory_space<vmem>>, vector<4x16xbf16>,
    %c0_49 = arith.constant 0 : index
    %c0_50 = arith.constant 0 : index
    %c112 = arith.constant 112 : index
    %82 = vector.load %arg1[%c0_49, %c0_50, %c112] : memref<2x4x256xbf16, #tpu.memory_space<vmem>>, vector<1x4x16xbf16>
    %83 = vector.shape_cast %82 : vector<1x4x16xbf16> to vector<4x16xbf16>
    %c0_51 = arith.constant 0 : index
    %c145 = arith.constant 145 : index
    %84 = vector.load %arg6[%c0_51, %c145] : memref<4x432xbf16, #tpu.memory_space<vmem>>, vector<4x16xbf16>
    tpu.vector_store %arg6[%c0_51, %c145], %83 {strides = array<i32>} : memref<4x432xbf16, #tpu.memory_space<vmem>>, vector<4x16xbf16>,
    %c0_52 = arith.constant 0 : index
    %c0_53 = arith.constant 0 : index
    %c128 = arith.constant 128 : index
    %85 = vector.load %arg1[%c0_52, %c0_53, %c128] : memref<2x4x256xbf16, #tpu.memory_space<vmem>>, vector<1x4x16xbf16>
    %86 = vector.shape_cast %85 : vector<1x4x16xbf16> to vector<4x16xbf16>
    %c0_54 = arith.constant 0 : index
    %c163 = arith.constant 163 : index
    %87 = vector.load %arg6[%c0_54, %c163] : memref<4x432xbf16, #tpu.memory_space<vmem>>, vector<4x16xbf16>
    tpu.vector_store %arg6[%c0_54, %c163], %86 {strides = array<i32>} : memref<4x432xbf16, #tpu.memory_space<vmem>>, vector<4x16xbf16>,
    %c0_55 = arith.constant 0 : index
    %c0_56 = arith.constant 0 : index
    %c144 = arith.constant 144 : index
    %88 = vector.load %arg1[%c0_55, %c0_56, %c144] : memref<2x4x256xbf16, #tpu.memory_space<vmem>>, vector<1x4x16xbf16>
    %89 = vector.shape_cast %88 : vector<1x4x16xbf16> to vector<4x16xbf16>
    %c0_57 = arith.constant 0 : index
    %c181 = arith.constant 181 : index
    %90 = vector.load %arg6[%c0_57, %c181] : memref<4x432xbf16, #tpu.memory_space<vmem>>, vector<4x16xbf16>
    tpu.vector_store %arg6[%c0_57, %c181], %89 {strides = array<i32>} : memref<4x432xbf16, #tpu.memory_space<vmem>>, vector<4x16xbf16>,
    %c0_58 = arith.constant 0 : index
    %c0_59 = arith.constant 0 : index
    %c160 = arith.constant 160 : index
    %91 = vector.load %arg1[%c0_58, %c0_59, %c160] : memref<2x4x256xbf16, #tpu.memory_space<vmem>>, vector<1x4x16xbf16>
    %92 = vector.shape_cast %91 : vector<1x4x16xbf16> to vector<4x16xbf16>
    %c0_60 = arith.constant 0 : index
    %c199 = arith.constant 199 : index
    %93 = vector.load %arg6[%c0_60, %c199] : memref<4x432xbf16, #tpu.memory_space<vmem>>, vector<4x16xbf16>
    tpu.vector_store %arg6[%c0_60, %c199], %92 {strides = array<i32>} : memref<4x432xbf16, #tpu.memory_space<vmem>>, vector<4x16xbf16>,
    %c0_61 = arith.constant 0 : index
    %c0_62 = arith.constant 0 : index
    %c176 = arith.constant 176 : index
    %94 = vector.load %arg1[%c0_61, %c0_62, %c176] : memref<2x4x256xbf16, #tpu.memory_space<vmem>>, vector<1x4x16xbf16>
    %95 = vector.shape_cast %94 : vector<1x4x16xbf16> to vector<4x16xbf16>
    %c0_63 = arith.constant 0 : index
    %c217 = arith.constant 217 : index
    %96 = vector.load %arg6[%c0_63, %c217] : memref<4x432xbf16, #tpu.memory_space<vmem>>, vector<4x16xbf16>
    tpu.vector_store %arg6[%c0_63, %c217], %95 {strides = array<i32>} : memref<4x432xbf16, #tpu.memory_space<vmem>>, vector<4x16xbf16>,
    %c0_64 = arith.constant 0 : index
    %c0_65 = arith.constant 0 : index
    %c192 = arith.constant 192 : index
    %97 = vector.load %arg1[%c0_64, %c0_65, %c192] : memref<2x4x256xbf16, #tpu.memory_space<vmem>>, vector<1x4x16xbf16>
    %98 = vector.shape_cast %97 : vector<1x4x16xbf16> to vector<4x16xbf16>
    %c0_66 = arith.constant 0 : index
    %c235 = arith.constant 235 : index
    %99 = vector.load %arg6[%c0_66, %c235] : memref<4x432xbf16, #tpu.memory_space<vmem>>, vector<4x16xbf16>
    tpu.vector_store %arg6[%c0_66, %c235], %98 {strides = array<i32>} : memref<4x432xbf16, #tpu.memory_space<vmem>>, vector<4x16xbf16>,
    %c0_67 = arith.constant 0 : index
    %c0_68 = arith.constant 0 : index
    %c208 = arith.constant 208 : index
    %100 = vector.load %arg1[%c0_67, %c0_68, %c208] : memref<2x4x256xbf16, #tpu.memory_space<vmem>>, vector<1x4x16xbf16>
    %101 = vector.shape_cast %100 : vector<1x4x16xbf16> to vector<4x16xbf16>
    %c0_69 = arith.constant 0 : index
    %c253 = arith.constant 253 : index
    %102 = vector.load %arg6[%c0_69, %c253] : memref<4x432xbf16, #tpu.memory_space<vmem>>, vector<4x16xbf16>
    tpu.vector_store %arg6[%c0_69, %c253], %101 {strides = array<i32>} : memref<4x432xbf16, #tpu.memory_space<vmem>>, vector<4x16xbf16>,
    %c0_70 = arith.constant 0 : index
    %c0_71 = arith.constant 0 : index
    %c224 = arith.constant 224 : index
    %103 = vector.load %arg1[%c0_70, %c0_71, %c224] : memref<2x4x256xbf16, #tpu.memory_space<vmem>>, vector<1x4x16xbf16>
    %104 = vector.shape_cast %103 : vector<1x4x16xbf16> to vector<4x16xbf16>
    %c0_72 = arith.constant 0 : index
    %c271 = arith.constant 271 : index
    %105 = vector.load %arg6[%c0_72, %c271] : memref<4x432xbf16, #tpu.memory_space<vmem>>, vector<4x16xbf16>
    tpu.vector_store %arg6[%c0_72, %c271], %104 {strides = array<i32>} : memref<4x432xbf16, #tpu.memory_space<vmem>>, vector<4x16xbf16>,
    %c0_73 = arith.constant 0 : index
    %c0_74 = arith.constant 0 : index
    %c240 = arith.constant 240 : index
    %106 = vector.load %arg1[%c0_73, %c0_74, %c240] : memref<2x4x256xbf16, #tpu.memory_space<vmem>>, vector<1x4x16xbf16>
    %107 = vector.shape_cast %106 : vector<1x4x16xbf16> to vector<4x16xbf16>
    %c0_75 = arith.constant 0 : index
    %c289 = arith.constant 289 : index
    %108 = vector.load %arg6[%c0_75, %c289] : memref<4x432xbf16, #tpu.memory_space<vmem>>, vector<4x16xbf16>
    tpu.vector_store %arg6[%c0_75, %c289], %107 {strides = array<i32>} : memref<4x432xbf16, #tpu.memory_space<vmem>>, vector<4x16xbf16>,
    %c0_76 = arith.constant 0 : index
    %c0_77 = arith.constant 0 : index
    %109 = vector.load %arg6[%c0_76, %c0_77] : memref<4x432xbf16, #tpu.memory_space<vmem>>, vector<4x384xbf16>
    %c0_78 = arith.constant 0 : index
    %c0_79 = arith.constant 0 : index
    %110 = vector.load %arg7[%c0_78, %c0_79] : memref<36x384xbf16, #tpu.memory_space<vmem>>, vector<4x384xbf16>
    tpu.vector_store %arg7[%c0_78, %c0_79], %109 {strides = array<i32>} : memref<36x384xbf16, #tpu.memory_space<vmem>>, vector<4x384xbf16>,
    %c0_80 = arith.constant 0 : index
    %c1_81 = arith.constant 1 : index
    %111 = vector.load %arg6[%c0_80, %c1_81] : memref<4x432xbf16, #tpu.memory_space<vmem>>, vector<4x384xbf16>
    %c4 = arith.constant 4 : index
    %c0_82 = arith.constant 0 : index
    %112 = vector.load %arg7[%c4, %c0_82] : memref<36x384xbf16, #tpu.memory_space<vmem>>, vector<4x384xbf16>
    tpu.vector_store %arg7[%c4, %c0_82], %111 {strides = array<i32>} : memref<36x384xbf16, #tpu.memory_space<vmem>>, vector<4x384xbf16>,
    %c0_83 = arith.constant 0 : index
    %c2_84 = arith.constant 2 : index
    %113 = vector.load %arg6[%c0_83, %c2_84] : memref<4x432xbf16, #tpu.memory_space<vmem>>, vector<4x384xbf16>
    %c8 = arith.constant 8 : index
    %c0_85 = arith.constant 0 : index
    %114 = vector.load %arg7[%c8, %c0_85] : memref<36x384xbf16, #tpu.memory_space<vmem>>, vector<4x384xbf16>
    tpu.vector_store %arg7[%c8, %c0_85], %113 {strides = array<i32>} : memref<36x384xbf16, #tpu.memory_space<vmem>>, vector<4x384xbf16>,
    %c0_86 = arith.constant 0 : index
    %c18 = arith.constant 18 : index
    %115 = vector.load %arg6[%c0_86, %c18] : memref<4x432xbf16, #tpu.memory_space<vmem>>, vector<4x384xbf16>
    %c12 = arith.constant 12 : index
    %c0_87 = arith.constant 0 : index
    %116 = vector.load %arg7[%c12, %c0_87] : memref<36x384xbf16, #tpu.memory_space<vmem>>, vector<4x384xbf16>
    tpu.vector_store %arg7[%c12, %c0_87], %115 {strides = array<i32>} : memref<36x384xbf16, #tpu.memory_space<vmem>>, vector<4x384xbf16>,
    %c0_88 = arith.constant 0 : index
    %c19_89 = arith.constant 19 : index
    %117 = vector.load %arg6[%c0_88, %c19_89] : memref<4x432xbf16, #tpu.memory_space<vmem>>, vector<4x384xbf16>
    %c16_90 = arith.constant 16 : index
    %c0_91 = arith.constant 0 : index
    %118 = vector.load %arg7[%c16_90, %c0_91] : memref<36x384xbf16, #tpu.memory_space<vmem>>, vector<4x384xbf16>
    tpu.vector_store %arg7[%c16_90, %c0_91], %117 {strides = array<i32>} : memref<36x384xbf16, #tpu.memory_space<vmem>>, vector<4x384xbf16>,
    %c0_92 = arith.constant 0 : index
    %c20 = arith.constant 20 : index
    %119 = vector.load %arg6[%c0_92, %c20] : memref<4x432xbf16, #tpu.memory_space<vmem>>, vector<4x384xbf16>
    %c20_93 = arith.constant 20 : index
    %c0_94 = arith.constant 0 : index
    %120 = vector.load %arg7[%c20_93, %c0_94] : memref<36x384xbf16, #tpu.memory_space<vmem>>, vector<4x384xbf16>
    tpu.vector_store %arg7[%c20_93, %c0_94], %119 {strides = array<i32>} : memref<36x384xbf16, #tpu.memory_space<vmem>>, vector<4x384xbf16>,
    %c0_95 = arith.constant 0 : index
    %c36 = arith.constant 36 : index
    %121 = vector.load %arg6[%c0_95, %c36] : memref<4x432xbf16, #tpu.memory_space<vmem>>, vector<4x384xbf16>
    %c24 = arith.constant 24 : index
    %c0_96 = arith.constant 0 : index
    %122 = vector.load %arg7[%c24, %c0_96] : memref<36x384xbf16, #tpu.memory_space<vmem>>, vector<4x384xbf16>
    tpu.vector_store %arg7[%c24, %c0_96], %121 {strides = array<i32>} : memref<36x384xbf16, #tpu.memory_space<vmem>>, vector<4x384xbf16>,
    %c0_97 = arith.constant 0 : index
    %c37_98 = arith.constant 37 : index
    %123 = vector.load %arg6[%c0_97, %c37_98] : memref<4x432xbf16, #tpu.memory_space<vmem>>, vector<4x384xbf16>
    %c28 = arith.constant 28 : index
    %c0_99 = arith.constant 0 : index
    %124 = vector.load %arg7[%c28, %c0_99] : memref<36x384xbf16, #tpu.memory_space<vmem>>, vector<4x384xbf16>
    tpu.vector_store %arg7[%c28, %c0_99], %123 {strides = array<i32>} : memref<36x384xbf16, #tpu.memory_space<vmem>>, vector<4x384xbf16>,
    %c0_100 = arith.constant 0 : index
    %c38 = arith.constant 38 : index
    %125 = vector.load %arg6[%c0_100, %c38] : memref<4x432xbf16, #tpu.memory_space<vmem>>, vector<4x384xbf16>
    %c32_101 = arith.constant 32 : index
    %c0_102 = arith.constant 0 : index
    %126 = vector.load %arg7[%c32_101, %c0_102] : memref<36x384xbf16, #tpu.memory_space<vmem>>, vector<4x384xbf16>
    tpu.vector_store %arg7[%c32_101, %c0_102], %125 {strides = array<i32>} : memref<36x384xbf16, #tpu.memory_space<vmem>>, vector<4x384xbf16>,
    %127 = arith.truncf %45 : vector<8x36xf32> to vector<8x36xbf16>
    %c0_103 = arith.constant 0 : index
    %c0_104 = arith.constant 0 : index
    %128 = vector.load %arg7[%c0_103, %c0_104] : memref<36x384xbf16, #tpu.memory_space<vmem>>, vector<36x384xbf16>
    %cst_105 = arith.constant dense<0.000000e+00> : vector<8x384xf32>
    %129 = tpu.matmul %127, %128, %cst_105 {dimension_numbers = #tpu.dot_dimension_numbers<[1], [0], [0], [1], [0, 0, 1, 1], [], []>} : vector<8x36xbf16>, vector<36x384xbf16>, vector<8x384xf32> -> vector<8x384xf32>
    %130 = vector.broadcast %60 : vector<8x1xf32> to vector<8x384xf32>
    %131 = arith.addf %129, %130 : vector<8x384xf32>
    %c0_106 = arith.constant 0 : index
    %c0_107 = arith.constant 0 : index
    %c0_108 = arith.constant 0 : index
    %132 = vector.load %arg5[%c0_106, %c0_107, %c0_108] : memref<2x8x384xf32, #tpu.memory_space<vmem>>, vector<1x8x384xf32>
    %133 = vector.shape_cast %132 : vector<1x8x384xf32> to vector<8x384xf32>
    %134 = vector.shape_cast %131 : vector<8x384xf32> to vector<1x8x384xf32>
    tpu.vector_store %arg5[%c0_106, %c0_107, %c0_108], %134 {strides = array<i32>} : memref<2x8x384xf32, #tpu.memory_space<vmem>>, vector<1x8x384xf32>,
    %c1_109 = arith.constant 1 : index
    %c0_110 = arith.constant 0 : index
    %c0_111 = arith.constant 0 : index
    %135 = vector.load %arg1[%c1_109, %c0_110, %c0_111] : memref<2x4x256xbf16, #tpu.memory_space<vmem>>, vector<1x4x256xbf16>
    %136 = vector.shape_cast %135 : vector<1x4x256xbf16> to vector<4x256xbf16>
    %137 = arith.extf %136 : vector<4x256xbf16> to vector<4x256xf32>
    %cst_112 = arith.constant dense<0.000000e+00> : vector<4xf32>
    %138 = vector.multi_reduction <add>, %137, %cst_112 [1] : vector<4x256xf32> to vector<4xf32>
    %139 = vector.shape_cast %138 : vector<4xf32> to vector<4x1xf32>
    %cst_113 = arith.constant 3.906250e-03 : f32
    %140 = vector.broadcast %cst_113 : f32 to vector<4x1xf32>
    %141 = arith.mulf %139, %140 : vector<4x1xf32>
    %c0_114 = arith.constant 0 : index
    %c0_115 = arith.constant 0 : index
    %142 = vector.load %arg2[%c0_114, %c0_115] : memref<4x4xf32, #tpu.memory_space<vmem>>, vector<4x4xf32>
    %143 = vector.broadcast %141 : vector<4x1xf32> to vector<4x4xf32>
    %144 = arith.mulf %143, %142 : vector<4x4xf32>
    %cst_116 = arith.constant dense<0.000000e+00> : vector<4xf32>
    %145 = vector.multi_reduction <add>, %144, %cst_116 [0] : vector<4x4xf32> to vector<4xf32>
    %146 = vector.shape_cast %145 : vector<4xf32> to vector<1x4xf32>
    %147 = arith.negf %146 : vector<1x4xf32>
    %148 = math.exp %147 : vector<1x4xf32>
    %cst_117 = arith.constant 1.000000e+00 : f32
    %149 = vector.broadcast %cst_117 : f32 to vector<1x4xf32>
    %150 = arith.addf %149, %148 : vector<1x4xf32>
    %151 = arith.divf %149, %150 : vector<1x4xf32>
    %152 = vector.extract_strided_slice %151 {offsets = [0, 0], sizes = [1, 1], strides = [1, 1]} : vector<1x4xf32> to vector<1x1xf32>
    %153 = vector.extract_strided_slice %151 {offsets = [0, 1], sizes = [1, 1], strides = [1, 1]} : vector<1x4xf32> to vector<1x1xf32>
    %154 = vector.extract_strided_slice %151 {offsets = [0, 2], sizes = [1, 1], strides = [1, 1]} : vector<1x4xf32> to vector<1x1xf32>
    %155 = vector.extract_strided_slice %151 {offsets = [0, 3], sizes = [1, 1], strides = [1, 1]} : vector<1x4xf32> to vector<1x1xf32>
    %c0_118 = arith.constant 0 : index
    %c0_119 = arith.constant 0 : index
    %c0_120 = arith.constant 0 : index
    %156 = vector.load %arg3[%c0_118, %c0_119, %c0_120] : memref<4x8x36xbf16, #tpu.memory_space<vmem>>, vector<1x8x36xbf16>
    %157 = vector.shape_cast %156 : vector<1x8x36xbf16> to vector<8x36xbf16>
    %158 = arith.extf %157 : vector<8x36xbf16> to vector<8x36xf32>
    %159 = vector.broadcast %152 : vector<1x1xf32> to vector<8x36xf32>
    %160 = arith.mulf %159, %158 : vector<8x36xf32>
    %c1_121 = arith.constant 1 : index
    %c0_122 = arith.constant 0 : index
    %c0_123 = arith.constant 0 : index
    %161 = vector.load %arg3[%c1_121, %c0_122, %c0_123] : memref<4x8x36xbf16, #tpu.memory_space<vmem>>, vector<1x8x36xbf16>
    %162 = vector.shape_cast %161 : vector<1x8x36xbf16> to vector<8x36xbf16>
    %163 = arith.extf %162 : vector<8x36xbf16> to vector<8x36xf32>
    %164 = vector.broadcast %153 : vector<1x1xf32> to vector<8x36xf32>
    %165 = arith.mulf %164, %163 : vector<8x36xf32>
    %166 = arith.addf %160, %165 : vector<8x36xf32>
    %c2_124 = arith.constant 2 : index
    %c0_125 = arith.constant 0 : index
    %c0_126 = arith.constant 0 : index
    %167 = vector.load %arg3[%c2_124, %c0_125, %c0_126] : memref<4x8x36xbf16, #tpu.memory_space<vmem>>, vector<1x8x36xbf16>
    %168 = vector.shape_cast %167 : vector<1x8x36xbf16> to vector<8x36xbf16>
    %169 = arith.extf %168 : vector<8x36xbf16> to vector<8x36xf32>
    %170 = vector.broadcast %154 : vector<1x1xf32> to vector<8x36xf32>
    %171 = arith.mulf %170, %169 : vector<8x36xf32>
    %172 = arith.addf %166, %171 : vector<8x36xf32>
    %c3_127 = arith.constant 3 : index
    %c0_128 = arith.constant 0 : index
    %c0_129 = arith.constant 0 : index
    %173 = vector.load %arg3[%c3_127, %c0_128, %c0_129] : memref<4x8x36xbf16, #tpu.memory_space<vmem>>, vector<1x8x36xbf16>
    %174 = vector.shape_cast %173 : vector<1x8x36xbf16> to vector<8x36xbf16>
    %175 = arith.extf %174 : vector<8x36xbf16> to vector<8x36xf32>
    %176 = vector.broadcast %155 : vector<1x1xf32> to vector<8x36xf32>
    %177 = arith.mulf %176, %175 : vector<8x36xf32>
    %178 = arith.addf %172, %177 : vector<8x36xf32>
    %c0_130 = arith.constant 0 : index
    %c0_131 = arith.constant 0 : index
    %179 = vector.load %arg4[%c0_130, %c0_131] : memref<8x4xf32, #tpu.memory_space<vmem>>, vector<8x1xf32>
    %180 = vector.broadcast %152 : vector<1x1xf32> to vector<8x1xf32>
    %181 = arith.mulf %180, %179 : vector<8x1xf32>
    %c0_132 = arith.constant 0 : index
    %c1_133 = arith.constant 1 : index
    %182 = vector.load %arg4[%c0_132, %c1_133] : memref<8x4xf32, #tpu.memory_space<vmem>>, vector<8x1xf32>
    %183 = vector.broadcast %153 : vector<1x1xf32> to vector<8x1xf32>
    %184 = arith.mulf %183, %182 : vector<8x1xf32>
    %185 = arith.addf %181, %184 : vector<8x1xf32>
    %c0_134 = arith.constant 0 : index
    %c2_135 = arith.constant 2 : index
    %186 = vector.load %arg4[%c0_134, %c2_135] : memref<8x4xf32, #tpu.memory_space<vmem>>, vector<8x1xf32>
    %187 = vector.broadcast %154 : vector<1x1xf32> to vector<8x1xf32>
    %188 = arith.mulf %187, %186 : vector<8x1xf32>
    %189 = arith.addf %185, %188 : vector<8x1xf32>
    %c0_136 = arith.constant 0 : index
    %c3_137 = arith.constant 3 : index
    %190 = vector.load %arg4[%c0_136, %c3_137] : memref<8x4xf32, #tpu.memory_space<vmem>>, vector<8x1xf32>
    %191 = vector.broadcast %155 : vector<1x1xf32> to vector<8x1xf32>
    %192 = arith.mulf %191, %190 : vector<8x1xf32>
    %193 = arith.addf %189, %192 : vector<8x1xf32>
    %c1_138 = arith.constant 1 : index
    %c0_139 = arith.constant 0 : index
    %c0_140 = arith.constant 0 : index
    %194 = vector.load %arg1[%c1_138, %c0_139, %c0_140] : memref<2x4x256xbf16, #tpu.memory_space<vmem>>, vector<1x4x16xbf16>
    %195 = vector.shape_cast %194 : vector<1x4x16xbf16> to vector<4x16xbf16>
    %c0_141 = arith.constant 0 : index
    %c19_142 = arith.constant 19 : index
    %196 = vector.load %arg6[%c0_141, %c19_142] : memref<4x432xbf16, #tpu.memory_space<vmem>>, vector<4x16xbf16>
    tpu.vector_store %arg6[%c0_141, %c19_142], %195 {strides = array<i32>} : memref<4x432xbf16, #tpu.memory_space<vmem>>, vector<4x16xbf16>,
    %c1_143 = arith.constant 1 : index
    %c0_144 = arith.constant 0 : index
    %c16_145 = arith.constant 16 : index
    %197 = vector.load %arg1[%c1_143, %c0_144, %c16_145] : memref<2x4x256xbf16, #tpu.memory_space<vmem>>, vector<1x4x16xbf16>
    %198 = vector.shape_cast %197 : vector<1x4x16xbf16> to vector<4x16xbf16>
    %c0_146 = arith.constant 0 : index
    %c37_147 = arith.constant 37 : index
    %199 = vector.load %arg6[%c0_146, %c37_147] : memref<4x432xbf16, #tpu.memory_space<vmem>>, vector<4x16xbf16>
    tpu.vector_store %arg6[%c0_146, %c37_147], %198 {strides = array<i32>} : memref<4x432xbf16, #tpu.memory_space<vmem>>, vector<4x16xbf16>,
    %c1_148 = arith.constant 1 : index
    %c0_149 = arith.constant 0 : index
    %c32_150 = arith.constant 32 : index
    %200 = vector.load %arg1[%c1_148, %c0_149, %c32_150] : memref<2x4x256xbf16, #tpu.memory_space<vmem>>, vector<1x4x16xbf16>
    %201 = vector.shape_cast %200 : vector<1x4x16xbf16> to vector<4x16xbf16>
    %c0_151 = arith.constant 0 : index
    %c55_152 = arith.constant 55 : index
    %202 = vector.load %arg6[%c0_151, %c55_152] : memref<4x432xbf16, #tpu.memory_space<vmem>>, vector<4x16xbf16>
    tpu.vector_store %arg6[%c0_151, %c55_152], %201 {strides = array<i32>} : memref<4x432xbf16, #tpu.memory_space<vmem>>, vector<4x16xbf16>,
    %c1_153 = arith.constant 1 : index
    %c0_154 = arith.constant 0 : index
    %c48_155 = arith.constant 48 : index
    %203 = vector.load %arg1[%c1_153, %c0_154, %c48_155] : memref<2x4x256xbf16, #tpu.memory_space<vmem>>, vector<1x4x16xbf16>
    %204 = vector.shape_cast %203 : vector<1x4x16xbf16> to vector<4x16xbf16>
    %c0_156 = arith.constant 0 : index
    %c73_157 = arith.constant 73 : index
    %205 = vector.load %arg6[%c0_156, %c73_157] : memref<4x432xbf16, #tpu.memory_space<vmem>>, vector<4x16xbf16>
    tpu.vector_store %arg6[%c0_156, %c73_157], %204 {strides = array<i32>} : memref<4x432xbf16, #tpu.memory_space<vmem>>, vector<4x16xbf16>,
    %c1_158 = arith.constant 1 : index
    %c0_159 = arith.constant 0 : index
    %c64_160 = arith.constant 64 : index
    %206 = vector.load %arg1[%c1_158, %c0_159, %c64_160] : memref<2x4x256xbf16, #tpu.memory_space<vmem>>, vector<1x4x16xbf16>
    %207 = vector.shape_cast %206 : vector<1x4x16xbf16> to vector<4x16xbf16>
    %c0_161 = arith.constant 0 : index
    %c91_162 = arith.constant 91 : index
    %208 = vector.load %arg6[%c0_161, %c91_162] : memref<4x432xbf16, #tpu.memory_space<vmem>>, vector<4x16xbf16>
    tpu.vector_store %arg6[%c0_161, %c91_162], %207 {strides = array<i32>} : memref<4x432xbf16, #tpu.memory_space<vmem>>, vector<4x16xbf16>,
    %c1_163 = arith.constant 1 : index
    %c0_164 = arith.constant 0 : index
    %c80_165 = arith.constant 80 : index
    %209 = vector.load %arg1[%c1_163, %c0_164, %c80_165] : memref<2x4x256xbf16, #tpu.memory_space<vmem>>, vector<1x4x16xbf16>
    %210 = vector.shape_cast %209 : vector<1x4x16xbf16> to vector<4x16xbf16>
    %c0_166 = arith.constant 0 : index
    %c109_167 = arith.constant 109 : index
    %211 = vector.load %arg6[%c0_166, %c109_167] : memref<4x432xbf16, #tpu.memory_space<vmem>>, vector<4x16xbf16>
    tpu.vector_store %arg6[%c0_166, %c109_167], %210 {strides = array<i32>} : memref<4x432xbf16, #tpu.memory_space<vmem>>, vector<4x16xbf16>,
    %c1_168 = arith.constant 1 : index
    %c0_169 = arith.constant 0 : index
    %c96_170 = arith.constant 96 : index
    %212 = vector.load %arg1[%c1_168, %c0_169, %c96_170] : memref<2x4x256xbf16, #tpu.memory_space<vmem>>, vector<1x4x16xbf16>
    %213 = vector.shape_cast %212 : vector<1x4x16xbf16> to vector<4x16xbf16>
    %c0_171 = arith.constant 0 : index
    %c127_172 = arith.constant 127 : index
    %214 = vector.load %arg6[%c0_171, %c127_172] : memref<4x432xbf16, #tpu.memory_space<vmem>>, vector<4x16xbf16>
    tpu.vector_store %arg6[%c0_171, %c127_172], %213 {strides = array<i32>} : memref<4x432xbf16, #tpu.memory_space<vmem>>, vector<4x16xbf16>,
    %c1_173 = arith.constant 1 : index
    %c0_174 = arith.constant 0 : index
    %c112_175 = arith.constant 112 : index
    %215 = vector.load %arg1[%c1_173, %c0_174, %c112_175] : memref<2x4x256xbf16, #tpu.memory_space<vmem>>, vector<1x4x16xbf16>
    %216 = vector.shape_cast %215 : vector<1x4x16xbf16> to vector<4x16xbf16>
    %c0_176 = arith.constant 0 : index
    %c145_177 = arith.constant 145 : index
    %217 = vector.load %arg6[%c0_176, %c145_177] : memref<4x432xbf16, #tpu.memory_space<vmem>>, vector<4x16xbf16>
    tpu.vector_store %arg6[%c0_176, %c145_177], %216 {strides = array<i32>} : memref<4x432xbf16, #tpu.memory_space<vmem>>, vector<4x16xbf16>,
    %c1_178 = arith.constant 1 : index
    %c0_179 = arith.constant 0 : index
    %c128_180 = arith.constant 128 : index
    %218 = vector.load %arg1[%c1_178, %c0_179, %c128_180] : memref<2x4x256xbf16, #tpu.memory_space<vmem>>, vector<1x4x16xbf16>
    %219 = vector.shape_cast %218 : vector<1x4x16xbf16> to vector<4x16xbf16>
    %c0_181 = arith.constant 0 : index
    %c163_182 = arith.constant 163 : index
    %220 = vector.load %arg6[%c0_181, %c163_182] : memref<4x432xbf16, #tpu.memory_space<vmem>>, vector<4x16xbf16>
    tpu.vector_store %arg6[%c0_181, %c163_182], %219 {strides = array<i32>} : memref<4x432xbf16, #tpu.memory_space<vmem>>, vector<4x16xbf16>,
    %c1_183 = arith.constant 1 : index
    %c0_184 = arith.constant 0 : index
    %c144_185 = arith.constant 144 : index
    %221 = vector.load %arg1[%c1_183, %c0_184, %c144_185] : memref<2x4x256xbf16, #tpu.memory_space<vmem>>, vector<1x4x16xbf16>
    %222 = vector.shape_cast %221 : vector<1x4x16xbf16> to vector<4x16xbf16>
    %c0_186 = arith.constant 0 : index
    %c181_187 = arith.constant 181 : index
    %223 = vector.load %arg6[%c0_186, %c181_187] : memref<4x432xbf16, #tpu.memory_space<vmem>>, vector<4x16xbf16>
    tpu.vector_store %arg6[%c0_186, %c181_187], %222 {strides = array<i32>} : memref<4x432xbf16, #tpu.memory_space<vmem>>, vector<4x16xbf16>,
    %c1_188 = arith.constant 1 : index
    %c0_189 = arith.constant 0 : index
    %c160_190 = arith.constant 160 : index
    %224 = vector.load %arg1[%c1_188, %c0_189, %c160_190] : memref<2x4x256xbf16, #tpu.memory_space<vmem>>, vector<1x4x16xbf16>
    %225 = vector.shape_cast %224 : vector<1x4x16xbf16> to vector<4x16xbf16>
    %c0_191 = arith.constant 0 : index
    %c199_192 = arith.constant 199 : index
    %226 = vector.load %arg6[%c0_191, %c199_192] : memref<4x432xbf16, #tpu.memory_space<vmem>>, vector<4x16xbf16>
    tpu.vector_store %arg6[%c0_191, %c199_192], %225 {strides = array<i32>} : memref<4x432xbf16, #tpu.memory_space<vmem>>, vector<4x16xbf16>,
    %c1_193 = arith.constant 1 : index
    %c0_194 = arith.constant 0 : index
    %c176_195 = arith.constant 176 : index
    %227 = vector.load %arg1[%c1_193, %c0_194, %c176_195] : memref<2x4x256xbf16, #tpu.memory_space<vmem>>, vector<1x4x16xbf16>
    %228 = vector.shape_cast %227 : vector<1x4x16xbf16> to vector<4x16xbf16>
    %c0_196 = arith.constant 0 : index
    %c217_197 = arith.constant 217 : index
    %229 = vector.load %arg6[%c0_196, %c217_197] : memref<4x432xbf16, #tpu.memory_space<vmem>>, vector<4x16xbf16>
    tpu.vector_store %arg6[%c0_196, %c217_197], %228 {strides = array<i32>} : memref<4x432xbf16, #tpu.memory_space<vmem>>, vector<4x16xbf16>,
    %c1_198 = arith.constant 1 : index
    %c0_199 = arith.constant 0 : index
    %c192_200 = arith.constant 192 : index
    %230 = vector.load %arg1[%c1_198, %c0_199, %c192_200] : memref<2x4x256xbf16, #tpu.memory_space<vmem>>, vector<1x4x16xbf16>
    %231 = vector.shape_cast %230 : vector<1x4x16xbf16> to vector<4x16xbf16>
    %c0_201 = arith.constant 0 : index
    %c235_202 = arith.constant 235 : index
    %232 = vector.load %arg6[%c0_201, %c235_202] : memref<4x432xbf16, #tpu.memory_space<vmem>>, vector<4x16xbf16>
    tpu.vector_store %arg6[%c0_201, %c235_202], %231 {strides = array<i32>} : memref<4x432xbf16, #tpu.memory_space<vmem>>, vector<4x16xbf16>,
    %c1_203 = arith.constant 1 : index
    %c0_204 = arith.constant 0 : index
    %c208_205 = arith.constant 208 : index
    %233 = vector.load %arg1[%c1_203, %c0_204, %c208_205] : memref<2x4x256xbf16, #tpu.memory_space<vmem>>, vector<1x4x16xbf16>
    %234 = vector.shape_cast %233 : vector<1x4x16xbf16> to vector<4x16xbf16>
    %c0_206 = arith.constant 0 : index
    %c253_207 = arith.constant 253 : index
    %235 = vector.load %arg6[%c0_206, %c253_207] : memref<4x432xbf16, #tpu.memory_space<vmem>>, vector<4x16xbf16>
    tpu.vector_store %arg6[%c0_206, %c253_207], %234 {strides = array<i32>} : memref<4x432xbf16, #tpu.memory_space<vmem>>, vector<4x16xbf16>,
    %c1_208 = arith.constant 1 : index
    %c0_209 = arith.constant 0 : index
    %c224_210 = arith.constant 224 : index
    %236 = vector.load %arg1[%c1_208, %c0_209, %c224_210] : memref<2x4x256xbf16, #tpu.memory_space<vmem>>, vector<1x4x16xbf16>
    %237 = vector.shape_cast %236 : vector<1x4x16xbf16> to vector<4x16xbf16>
    %c0_211 = arith.constant 0 : index
    %c271_212 = arith.constant 271 : index
    %238 = vector.load %arg6[%c0_211, %c271_212] : memref<4x432xbf16, #tpu.memory_space<vmem>>, vector<4x16xbf16>
    tpu.vector_store %arg6[%c0_211, %c271_212], %237 {strides = array<i32>} : memref<4x432xbf16, #tpu.memory_space<vmem>>, vector<4x16xbf16>,
    %c1_213 = arith.constant 1 : index
    %c0_214 = arith.constant 0 : index
    %c240_215 = arith.constant 240 : index
    %239 = vector.load %arg1[%c1_213, %c0_214, %c240_215] : memref<2x4x256xbf16, #tpu.memory_space<vmem>>, vector<1x4x16xbf16>
    %240 = vector.shape_cast %239 : vector<1x4x16xbf16> to vector<4x16xbf16>
    %c0_216 = arith.constant 0 : index
    %c289_217 = arith.constant 289 : index
    %241 = vector.load %arg6[%c0_216, %c289_217] : memref<4x432xbf16, #tpu.memory_space<vmem>>, vector<4x16xbf16>
    tpu.vector_store %arg6[%c0_216, %c289_217], %240 {strides = array<i32>} : memref<4x432xbf16, #tpu.memory_space<vmem>>, vector<4x16xbf16>,
    %c0_218 = arith.constant 0 : index
    %c0_219 = arith.constant 0 : index
    %242 = vector.load %arg6[%c0_218, %c0_219] : memref<4x432xbf16, #tpu.memory_space<vmem>>, vector<4x384xbf16>
    %c0_220 = arith.constant 0 : index
    %c0_221 = arith.constant 0 : index
    %243 = vector.load %arg7[%c0_220, %c0_221] : memref<36x384xbf16, #tpu.memory_space<vmem>>, vector<4x384xbf16>
    tpu.vector_store %arg7[%c0_220, %c0_221], %242 {strides = array<i32>} : memref<36x384xbf16, #tpu.memory_space<vmem>>, vector<4x384xbf16>,
    %c0_222 = arith.constant 0 : index
    %c1_223 = arith.constant 1 : index
    %244 = vector.load %arg6[%c0_222, %c1_223] : memref<4x432xbf16, #tpu.memory_space<vmem>>, vector<4x384xbf16>
    %c4_224 = arith.constant 4 : index
    %c0_225 = arith.constant 0 : index
    %245 = vector.load %arg7[%c4_224, %c0_225] : memref<36x384xbf16, #tpu.memory_space<vmem>>, vector<4x384xbf16>
    tpu.vector_store %arg7[%c4_224, %c0_225], %244 {strides = array<i32>} : memref<36x384xbf16, #tpu.memory_space<vmem>>, vector<4x384xbf16>,
    %c0_226 = arith.constant 0 : index
    %c2_227 = arith.constant 2 : index
    %246 = vector.load %arg6[%c0_226, %c2_227] : memref<4x432xbf16, #tpu.memory_space<vmem>>, vector<4x384xbf16>
    %c8_228 = arith.constant 8 : index
    %c0_229 = arith.constant 0 : index
    %247 = vector.load %arg7[%c8_228, %c0_229] : memref<36x384xbf16, #tpu.memory_space<vmem>>, vector<4x384xbf16>
    tpu.vector_store %arg7[%c8_228, %c0_229], %246 {strides = array<i32>} : memref<36x384xbf16, #tpu.memory_space<vmem>>, vector<4x384xbf16>,
    %c0_230 = arith.constant 0 : index
    %c18_231 = arith.constant 18 : index
    %248 = vector.load %arg6[%c0_230, %c18_231] : memref<4x432xbf16, #tpu.memory_space<vmem>>, vector<4x384xbf16>
    %c12_232 = arith.constant 12 : index
    %c0_233 = arith.constant 0 : index
    %249 = vector.load %arg7[%c12_232, %c0_233] : memref<36x384xbf16, #tpu.memory_space<vmem>>, vector<4x384xbf16>
    tpu.vector_store %arg7[%c12_232, %c0_233], %248 {strides = array<i32>} : memref<36x384xbf16, #tpu.memory_space<vmem>>, vector<4x384xbf16>,
    %c0_234 = arith.constant 0 : index
    %c19_235 = arith.constant 19 : index
    %250 = vector.load %arg6[%c0_234, %c19_235] : memref<4x432xbf16, #tpu.memory_space<vmem>>, vector<4x384xbf16>
    %c16_236 = arith.constant 16 : index
    %c0_237 = arith.constant 0 : index
    %251 = vector.load %arg7[%c16_236, %c0_237] : memref<36x384xbf16, #tpu.memory_space<vmem>>, vector<4x384xbf16>
    tpu.vector_store %arg7[%c16_236, %c0_237], %250 {strides = array<i32>} : memref<36x384xbf16, #tpu.memory_space<vmem>>, vector<4x384xbf16>,
    %c0_238 = arith.constant 0 : index
    %c20_239 = arith.constant 20 : index
    %252 = vector.load %arg6[%c0_238, %c20_239] : memref<4x432xbf16, #tpu.memory_space<vmem>>, vector<4x384xbf16>
    %c20_240 = arith.constant 20 : index
    %c0_241 = arith.constant 0 : index
    %253 = vector.load %arg7[%c20_240, %c0_241] : memref<36x384xbf16, #tpu.memory_space<vmem>>, vector<4x384xbf16>
    tpu.vector_store %arg7[%c20_240, %c0_241], %252 {strides = array<i32>} : memref<36x384xbf16, #tpu.memory_space<vmem>>, vector<4x384xbf16>,
    %c0_242 = arith.constant 0 : index
    %c36_243 = arith.constant 36 : index
    %254 = vector.load %arg6[%c0_242, %c36_243] : memref<4x432xbf16, #tpu.memory_space<vmem>>, vector<4x384xbf16>
    %c24_244 = arith.constant 24 : index
    %c0_245 = arith.constant 0 : index
    %255 = vector.load %arg7[%c24_244, %c0_245] : memref<36x384xbf16, #tpu.memory_space<vmem>>, vector<4x384xbf16>
    tpu.vector_store %arg7[%c24_244, %c0_245], %254 {strides = array<i32>} : memref<36x384xbf16, #tpu.memory_space<vmem>>, vector<4x384xbf16>,
    %c0_246 = arith.constant 0 : index
    %c37_247 = arith.constant 37 : index
    %256 = vector.load %arg6[%c0_246, %c37_247] : memref<4x432xbf16, #tpu.memory_space<vmem>>, vector<4x384xbf16>
    %c28_248 = arith.constant 28 : index
    %c0_249 = arith.constant 0 : index
    %257 = vector.load %arg7[%c28_248, %c0_249] : memref<36x384xbf16, #tpu.memory_space<vmem>>, vector<4x384xbf16>
    tpu.vector_store %arg7[%c28_248, %c0_249], %256 {strides = array<i32>} : memref<36x384xbf16, #tpu.memory_space<vmem>>, vector<4x384xbf16>,
    %c0_250 = arith.constant 0 : index
    %c38_251 = arith.constant 38 : index
    %258 = vector.load %arg6[%c0_250, %c38_251] : memref<4x432xbf16, #tpu.memory_space<vmem>>, vector<4x384xbf16>
    %c32_252 = arith.constant 32 : index
    %c0_253 = arith.constant 0 : index
    %259 = vector.load %arg7[%c32_252, %c0_253] : memref<36x384xbf16, #tpu.memory_space<vmem>>, vector<4x384xbf16>
    tpu.vector_store %arg7[%c32_252, %c0_253], %258 {strides = array<i32>} : memref<36x384xbf16, #tpu.memory_space<vmem>>, vector<4x384xbf16>,
    %260 = arith.truncf %178 : vector<8x36xf32> to vector<8x36xbf16>
    %c0_254 = arith.constant 0 : index
    %c0_255 = arith.constant 0 : index
    %261 = vector.load %arg7[%c0_254, %c0_255] : memref<36x384xbf16, #tpu.memory_space<vmem>>, vector<36x384xbf16>
    %cst_256 = arith.constant dense<0.000000e+00> : vector<8x384xf32>
    %262 = tpu.matmul %260, %261, %cst_256 {dimension_numbers = #tpu.dot_dimension_numbers<[1], [0], [0], [1], [0, 0, 1, 1], [], []>} : vector<8x36xbf16>, vector<36x384xbf16>, vector<8x384xf32> -> vector<8x384xf32>
    %263 = vector.broadcast %193 : vector<8x1xf32> to vector<8x384xf32>
    %264 = arith.addf %262, %263 : vector<8x384xf32>
    %c1_257 = arith.constant 1 : index
    %c0_258 = arith.constant 0 : index
    %c0_259 = arith.constant 0 : index
    %265 = vector.load %arg5[%c1_257, %c0_258, %c0_259] : memref<2x8x384xf32, #tpu.memory_space<vmem>>, vector<1x8x384xf32>
    %266 = vector.shape_cast %265 : vector<1x8x384xf32> to vector<8x384xf32>
    %267 = vector.shape_cast %264 : vector<8x384xf32> to vector<1x8x384xf32>
    tpu.vector_store %arg5[%c1_257, %c0_258, %c0_259], %267 {strides = array<i32>} : memref<2x8x384xf32, #tpu.memory_space<vmem>>, vector<1x8x384xf32>,
    return
  }
  func.func @transform_0(%arg0: i32) -> (i32, i32, i32) {
    %c0_i32 = arith.constant 0 : i32
    %c0_i32_0 = arith.constant 0 : i32
    %c0_i32_1 = arith.constant 0 : i32
    return %arg0, %c0_i32, %c0_i32_0 : i32, i32, i32
  }
  func.func @transform_1(%arg0: i32) -> (i32, i32) {
    %c0_i32 = arith.constant 0 : i32
    %c0_i32_0 = arith.constant 0 : i32
    %c0_i32_1 = arith.constant 0 : i32
    return %c0_i32, %c0_i32_0 : i32, i32
  }
  func.func @transform_2(%arg0: i32) -> (i32, i32, i32) {
    %c0_i32 = arith.constant 0 : i32
    %c0_i32_0 = arith.constant 0 : i32
    %c0_i32_1 = arith.constant 0 : i32
    %c0_i32_2 = arith.constant 0 : i32
    return %c0_i32, %c0_i32_0, %c0_i32_1 : i32, i32, i32
  }
  func.func @transform_3(%arg0: i32) -> (i32, i32) {
    %c0_i32 = arith.constant 0 : i32
    %c0_i32_0 = arith.constant 0 : i32
    %c0_i32_1 = arith.constant 0 : i32
    return %c0_i32, %c0_i32_0 : i32, i32
  }
  func.func @transform_4(%arg0: i32) -> (i32, i32, i32) {
    %c0_i32 = arith.constant 0 : i32
    %c0_i32_0 = arith.constant 0 : i32
    %c0_i32_1 = arith.constant 0 : i32
    return %arg0, %c0_i32, %c0_i32_0 : i32, i32, i32
  }
}

</mosaic_0001>

<llo_original>
// kernel: tpu_custom_call.1
$region0: #{tpu_custom_call.1}
  #allocation0 [shape = 'u32[]', space=smem, size = 0x4, offset = 0x4, fixed_abs, tag = 'smem constant byte address 0x4 - core index']
  #allocation1 [shape = 'u32[144,128]{1,0:T(1,128)}', space=vmem, size = 0x12000, scoped, tag = 'internal scratch']
  #allocation2 [shape = 'bf16[4,432]{1,0:T(4,128)(2,1)}', space=vmem, size = 0x1000, scoped, tag = 'scratch operand']
  #allocation3 [shape = 'bf16[36,384]{1,0:T(8,128)(2,1)}', space=vmem, size = 0x7800, scoped, tag = 'scratch operand']
  %s0 = inlined_call_operand.hbm [shape: bf16[4,4,256], index: 0, kind: input, shape index: {}]
  %s1 = inlined_call_operand.hbm [shape: f32[4,4], index: 1, kind: input, shape index: {}]
  %s2 = inlined_call_operand.vmem [shape: bf16[4,8,36], index: 2, kind: input, shape index: {}]
  %s3 = inlined_call_operand.vmem [shape: f32[8,4], index: 3, kind: input, shape index: {}]
  %s4 = inlined_call_operand.hbm [shape: f32[4,8,384], index: 4, kind: output, shape index: {}]
  %s5 = sld [smem:[#allocation0]]
  $region57: #{tpu_custom_call.1} parent=0
    _
  %s7 = ssub.s32 1, %s5
  %s8 = scalar_select 0, %s7, %s5
  $region1: #{tpu_custom_call.1} parent=0
    #allocation4 [shape = 'u8[8192]{0}', space=vmem, size = 0x2000, scoped, tag = 'input window, operand 0']
    #allocation5 [shape = 's32[2]{0}', space=sflag, size = 0x8, scoped, tag = 'scoped memory for tpu_custom_call.1']
    #allocation6 [shape = 's32[2]{0}', space=sflag, size = 0x8, scoped, tag = 'scoped memory for tpu_custom_call.1']
    #allocation7 [shape = 'u8[2048]{0}', space=vmem, size = 0x800, scoped, tag = 'input window, operand 1, single buffered']
    #allocation8 [shape = 's32[1]{0}', space=sflag, size = 0x4, scoped, tag = 'scoped memory for tpu_custom_call.1']
    #allocation9 [shape = 'u8[49152]{0}', space=vmem, size = 0xc000, scoped, tag = 'output window, operand 0']
    %9 = vsyncpa [#allocation5], 0
    %s10 = scalar_lea.sflag [#allocation5], 1
    %11 = vsyncpa %s10, 0
    %12 = vsyncpa [#allocation8], 0
    %13 = vsyncpa [#allocation6], 0
    %s14 = scalar_lea.sflag [#allocation6], 1
    %15 = vsyncpa %s14, 0
    loop: start=0, step=1, limit=4
    $region2: #{tpu_custom_call.1} parent=1 // loop_pre_header
      _
    $region3: #{tpu_custom_call.1} parent=1 // loop_header
      %s17 = sphi 0, %s21
      %p18 = scmp.ge.s32.totalorder %s17, 4
      %s27 = sphi 0, %s29
      %s30 = sphi 0, %s27
      %s31 = sphi 0, %s30
      %s47 = sphi 0, %s31
      %s51 = sphi 0, %s51
      %s53 = sphi 0, %s51
      %s54 = sphi 0, %s53
      %s68 = sphi 0, %s54
      %s72 = sphi 0, %s72
      %s74 = sphi 0, %s72
      %s75 = sphi 0, %s74
      %s89 = sphi 0, %s75
      %s93 = sphi 0, %s93
      %s95 = sphi 0, %s93
      %s96 = sphi 0, %s95
      %s110 = sphi 0, %s96
      %s116 = sphi 0, %s118
      %s119 = sphi 0, %s116
      %s120 = sphi 0, %s119
      %s136 = sphi 0, %s120
    $region4: #{tpu_custom_call.1} parent=1 // loop_header_branch
      %20 = sbr.rel (%p18) target = $region8
    $region5: #{tpu_custom_call.1} parent=1 // loop_body
      %s22 = ssub.s32 %s17, 1
      %s23 = ssub.s32 %s17, 2
      %s24 = sadd.s32 %s17, 1
      %s25 = ssub.s32 %s17, %s24
      %p26 = scmp.eq.s32.totalorder %s25, 0
      %s28 = sadd.s32 %s27, 1
      %s29 = scalar_select %p26, %s27, %s28
      %p32 = pneg %p26
      %p33 = scmp.eq.s32.totalorder %s17, 1
      %p34 = por %p32, %p33
      %p35 = scmp.ne.s32.totalorder %s27, %s30
      %p36 = scmp.eq.s32.totalorder %s17, 0
      %p37 = por %p35, %p36
      %p38 = scmp.ne.s32.totalorder %s27, %s30
      %p39 = scmp.eq.s32.totalorder %s22, 1
      %p40 = por %p38, %p39
      %p41 = scmp.ne.s32.totalorder %s30, %s31
      %p42 = scmp.eq.s32.totalorder %s22, 0
      %p43 = por %p41, %p42
      %p44 = scmp.ne.s32.totalorder %s30, %s31
      %p45 = scmp.eq.s32.totalorder %s23, 1
      %p46 = por %p44, %p45
      %p48 = scmp.ne.s32.totalorder %s31, %s47
      %p49 = scmp.eq.s32.totalorder %s23, 0
      %p50 = por %p48, %p49
      %s52 = sadd.s32 %s51, 1
      %p55 = scmp.eq.s32.totalorder %s17, 1
      %p56 = scmp.ne.s32.totalorder %s51, %s53
      %p57 = scmp.eq.s32.totalorder %s17, 0
      %p58 = por %p56, %p57
      %p59 = scmp.ne.s32.totalorder %s51, %s53
      %p60 = scmp.eq.s32.totalorder %s22, 1
      %p61 = por %p59, %p60
      %p62 = scmp.ne.s32.totalorder %s53, %s54
      %p63 = scmp.eq.s32.totalorder %s22, 0
      %p64 = por %p62, %p63
      %p65 = scmp.ne.s32.totalorder %s53, %s54
      %p66 = scmp.eq.s32.totalorder %s23, 1
      %p67 = por %p65, %p66
      %p69 = scmp.ne.s32.totalorder %s54, %s68
      %p70 = scmp.eq.s32.totalorder %s23, 0
      %p71 = por %p69, %p70
      %s73 = sadd.s32 %s72, 1
      %p76 = scmp.eq.s32.totalorder %s17, 1
      %p77 = scmp.ne.s32.totalorder %s72, %s74
      %p78 = scmp.eq.s32.totalorder %s17, 0
      %p79 = por %p77, %p78
      %p80 = scmp.ne.s32.totalorder %s72, %s74
      %p81 = scmp.eq.s32.totalorder %s22, 1
      %p82 = por %p80, %p81
      %p83 = scmp.ne.s32.totalorder %s74, %s75
      %p84 = scmp.eq.s32.totalorder %s22, 0
      %p85 = por %p83, %p84
      %p86 = scmp.ne.s32.totalorder %s74, %s75
      %p87 = scmp.eq.s32.totalorder %s23, 1
      %p88 = por %p86, %p87
      %p90 = scmp.ne.s32.totalorder %s75, %s89
      %p91 = scmp.eq.s32.totalorder %s23, 0
      %p92 = por %p90, %p91
      %s94 = sadd.s32 %s93, 1
      %p97 = scmp.eq.s32.totalorder %s17, 1
      %p98 = scmp.ne.s32.totalorder %s93, %s95
      %p99 = scmp.eq.s32.totalorder %s17, 0
      %p100 = por %p98, %p99
      %p101 = scmp.ne.s32.totalorder %s93, %s95
      %p102 = scmp.eq.s32.totalorder %s22, 1
      %p103 = por %p101, %p102
      %p104 = scmp.ne.s32.totalorder %s95, %s96
      %p105 = scmp.eq.s32.totalorder %s22, 0
      %p106 = por %p104, %p105
      %p107 = scmp.ne.s32.totalorder %s95, %s96
      %p108 = scmp.eq.s32.totalorder %s23, 1
      %p109 = por %p107, %p108
      %p111 = scmp.ne.s32.totalorder %s96, %s110
      %p112 = scmp.eq.s32.totalorder %s23, 0
      %p113 = por %p111, %p112
      %s114 = ssub.s32 %s17, %s24
      %p115 = scmp.eq.s32.totalorder %s114, 0
      %s117 = sadd.s32 %s116, 1
      %s118 = scalar_select %p115, %s116, %s117
      %p121 = pneg %p115
      %p122 = scmp.eq.s32.totalorder %s17, 1
      %p123 = por %p121, %p122
      %p124 = scmp.ne.s32.totalorder %s116, %s119
      %p125 = scmp.eq.s32.totalorder %s17, 0
      %p126 = por %p124, %p125
      %p127 = scmp.ne.s32.totalorder %s116, %s119
      %p128 = scmp.eq.s32.totalorder %s22, 1
      %p129 = por %p127, %p128
      %p130 = scmp.ne.s32.totalorder %s119, %s120
      %p131 = scmp.eq.s32.totalorder %s22, 0
      %p132 = por %p130, %p131
      %p133 = scmp.ne.s32.totalorder %s119, %s120
      %p134 = scmp.eq.s32.totalorder %s23, 1
      %p135 = por %p133, %p134
      %p137 = scmp.ne.s32.totalorder %s120, %s136
      %p138 = scmp.eq.s32.totalorder %s23, 0
      %p139 = por %p137, %p138
      %p140 = scmp.le.s32.totalorder 1, %s17
      %p141 = scmp.lt.s32.totalorder %s17, 3
      %p142 = pnand %p140, %p141
      %p143 = pneg %p142
      // Predicated region
      $region9: #{tpu_custom_call.1} parent=5 // pred_check
        _
      $region10: #{tpu_custom_call.1} parent=5 // pred_check_branch
        %145 = sbr.rel (%p142) target = $region12
      $region11: #{tpu_custom_call.1} parent=5 // pred_region
        %s146 = ssub.s32 %s17, 1
        // Predicated region
        $region13: #{tpu_custom_call.1} parent=11 // pred_check
          %p147 = pneg %p64
        $region14: #{tpu_custom_call.1} parent=11 // pred_check_branch
          %149 = sbr.rel (%p147) target = $region16
        $region15: #{tpu_custom_call.1} parent=11 // pred_region
          %s151 = ssub.s32 64, 64
          %152 = vsyncadd [#allocation8], %s151
          %s154 = sshll.u32 [#allocation7], 4
          %s155 = int_to_ptr.vmem [resolvable:$true] %s154
          %157 = dma.hbm_to_vmem [thread:$0]  %s1, 64, %s155, [#allocation8]
        $region16: #{tpu_custom_call.1} parent=11 // pred_fallthru
          _
        // Predicated region
        $region17: #{tpu_custom_call.1} parent=11 // pred_check
          %p158 = pneg %p85
        $region18: #{tpu_custom_call.1} parent=11 // pred_check_branch
          %160 = sbr.rel (%p158) target = $region20
        $region19: #{tpu_custom_call.1} parent=11 // pred_region
          _
        $region20: #{tpu_custom_call.1} parent=11 // pred_fallthru
          _
        // Predicated region
        $region21: #{tpu_custom_call.1} parent=11 // pred_check
          %p161 = pneg %p106
        $region22: #{tpu_custom_call.1} parent=11 // pred_check_branch
          %163 = sbr.rel (%p161) target = $region24
        $region23: #{tpu_custom_call.1} parent=11 // pred_region
          _
        $region24: #{tpu_custom_call.1} parent=11 // pred_fallthru
          _
      $region12: #{tpu_custom_call.1} parent=5 // pred_fallthru
        _
      %p164 = scmp.lt.s32.totalorder %s17, 2
      // Predicated region
      $region25: #{tpu_custom_call.1} parent=5 // pred_check
        %p165 = pneg %p164
      $region26: #{tpu_custom_call.1} parent=5 // pred_check_branch
        %167 = sbr.rel (%p165) target = $region28
      $region27: #{tpu_custom_call.1} parent=5 // pred_region
        // Predicated region
        $region29: #{tpu_custom_call.1} parent=27 // pred_check
          %p168 = pneg %p37
        $region30: #{tpu_custom_call.1} parent=27 // pred_check_branch
          %170 = sbr.rel (%p168) target = $region32
        $region31: #{tpu_custom_call.1} parent=27 // pred_region
          %s171 = sand.u32 %s27, 1
          %s172 = scalar_lea.sflag [#allocation5], %s171
          %s173 = sand.u32 %s27, 1
          %s174 = smul.addr %s173, 8
          %s175 = scalar_lea.vmem [#allocation4], %s174
          %s176 = smul.u32 2, %s17
          %s178 = ssub.s32 128, 128
          %179 = vsyncadd %s172, %s178
          %s180 = smul.addr %s176, 2
          %s181 = smul.addr %s180, 32
          %s182 = scalar_lea.hbm %s0, %s181
          %s183 = sshll.u32 %s175, 4
          %s184 = int_to_ptr.vmem [resolvable:$true] %s183
          %189 = dma.hbm_to_vmem [thread:$0]  %s182, 128, %s184, %s172, 64, 64, 4
        $region32: #{tpu_custom_call.1} parent=27 // pred_fallthru
          _
      $region28: #{tpu_custom_call.1} parent=5 // pred_fallthru
        _
      %p190 = scmp.le.s32.totalorder 1, %s17
      %p191 = scmp.lt.s32.totalorder %s17, 3
      %p192 = pnand %p190, %p191
      %p193 = pneg %p192
      // Predicated region
      $region33: #{tpu_custom_call.1} parent=5 // pred_check
        _
      $region34: #{tpu_custom_call.1} parent=5 // pred_check_branch
        %195 = sbr.rel (%p192) target = $region36
      $region35: #{tpu_custom_call.1} parent=5 // pred_region
        %s196 = ssub.s32 %s17, 1
        %s197 = sand.u32 %s30, 1
        %s198 = scalar_lea.sflag [#allocation5], %s197
        %s199 = sand.u32 %s30, 1
        %s200 = smul.addr %s199, 8
        %s201 = scalar_lea.vmem [#allocation4], %s200
        // Predicated region
        $region37: #{tpu_custom_call.1} parent=35 // pred_check
          %p202 = pneg %p43
        $region38: #{tpu_custom_call.1} parent=35 // pred_check_branch
          %204 = sbr.rel (%p202) target = $region40
        $region39: #{tpu_custom_call.1} parent=35 // pred_region
          %205 = dma.done %s198, 128
        $region40: #{tpu_custom_call.1} parent=35 // pred_fallthru
          _
        // Predicated region
        $region41: #{tpu_custom_call.1} parent=35 // pred_check
          %p206 = pneg %p64
        $region42: #{tpu_custom_call.1} parent=35 // pred_check_branch
          %208 = sbr.rel (%p206) target = $region44
        $region43: #{tpu_custom_call.1} parent=35 // pred_region
          %209 = dma.done [#allocation8], 64
        $region44: #{tpu_custom_call.1} parent=35 // pred_fallthru
          _
        %s210 = sand.u32 %s30, 1
        %s211 = scalar_lea.sflag [#allocation5], %s210
        %s212 = sand.u32 %s30, 1
        %s213 = smul.addr %s212, 8
        %s214 = scalar_lea.vmem [#allocation4], %s213
        %p215 = pneg %p43
        %p216 = pneg %p40
        %p217 = pneg %p64
        %p218 = pneg %p61
        %p219 = pneg %p85
        %p220 = pneg %p82
        %p221 = pneg %p106
        %p222 = pneg %p103
        %p223 = pneg %p132
        %p224 = pneg %p129
        %s225 = sand.u32 %s119, 1
        %s226 = scalar_lea.sflag [#allocation6], %s225
        %s227 = sand.u32 %s119, 1
        %s228 = smul.addr %s227, 48
        %s229 = scalar_lea.vmem [#allocation9], %s228
        %s230 = smul.u32 2, %s22
        %s231 = smul.u32 2, %s22
        %vm233 = vcmask 1041408
        %vm234 = vcmask 1043458
        %vm235 = vmor %vm234, %vm233
        %vm236 = vcmask 1045508
        %vm237 = vmor %vm236, %vm235
        %vm238 = vcmask 392198
        %vm239 = vmor %vm238, %vm237
        %240 = vst.msk [vmem:[#allocation2] sm:$0xff] %vm239, 0
        %v241 = vld [vmem:[%s201] sm:$0xf]
        %v242 = vunpack.c.l.bf16 %v241
        %v244 = vcombine.high %v242, %v242
        %vm246 = vcmask 1043456
        %v247 = vsel %vm246, %v242, 0.0
        %v248 = vsel %vm246, %v244, 0.0
        %v249 = vadd.f32 %v247, %v248
        %250 = vadd.xlane.f32.xlu0 %v249
        %v251 = vpop.xlane.xlu0 %250
        %v252 = vmul.f32 %v251, 0.00390625
        %v253 = vld [vmem:[#allocation7] sm:$0xf]
        %v254 = vmul.f32 %v252, %v253
        %vm255 = vcmask 27648
        %v256 = vsel %vm255, %v254, 0.0
        %v257 = vrot.slane %v256, 4
        %v258 = vadd.f32 %v256, %v257
        %v259 = vrot.slane %v258, 2
        %v260 = vadd.f32 %v258, %v259
        %v261 = vrot.slane %v260, 1
        %v262 = vadd.f32 %v260, %v261
        %v263 = vxor.u32 %v262, 2147483648
        %v264 = vmul.f32 %v263, 1.442695
        %v265 = vpow.pop %v264
        %v266 = vadd.f32 %v265, 1.0
        %v267 = vrcp.pop %v266
        %v268 = vmul.f32 1.0, %v267
        %v269 = vld [vmem:[%s2] sm:$0xf]
        %v270 = vunpack.c.l.bf16 %v269
        %272 = vset.pattern.permute.xlu0 0
        %273 = vperm.xlu0 %272, %v268
        %v274 = vpop.permute.xlu0 %273
        %v276 = vmul.f32 %v274, %v270
        %s277 = scalar_lea.vmem %s2, 4
        %v278 = vld [vmem:[%s277] sm:$0xf]
        %v279 = vunpack.c.l.bf16 %v278
        %280 = vset.pattern.permute.xlu0 1
        %281 = vperm.xlu0 %280, %v268
        %v282 = vpop.permute.xlu0 %281
        %v284 = vmul.f32 %v282, %v279
        %v285 = vadd.f32 %v276, %v284
        %s286 = scalar_lea.vmem %s2, 8
        %v287 = vld [vmem:[%s286] sm:$0xf]
        %v288 = vunpack.c.l.bf16 %v287
        %289 = vset.pattern.permute.xlu0 2
        %290 = vperm.xlu0 %289, %v268
        %v291 = vpop.permute.xlu0 %290
        %v293 = vmul.f32 %v291, %v288
        %v294 = vadd.f32 %v285, %v293
        %s295 = scalar_lea.vmem %s2, 12
        %v296 = vld [vmem:[%s295] sm:$0xf]
        %v297 = vunpack.c.l.bf16 %v296
        %298 = vset.pattern.permute.xlu0 3
        %299 = vperm.xlu0 %298, %v268
        %v300 = vpop.permute.xlu0 %299
        %v302 = vmul.f32 %v300, %v297
        %v303 = vadd.f32 %v294, %v302
        %v304 = vld [vmem:[%s3] sm:$0xff]
        %v305 = vmul.f32 %v268, %v304
        %307 = vrot.lane.b32.xlu0 %v305, 127
        %v308 = vpop.permute.xlu0 %307
        %v310 = vadd.f32 %v305, %v308
        %311 = vrot.lane.b32.xlu0 %v305, 126
        %v312 = vpop.permute.xlu0 %311
        %v314 = vadd.f32 %v310, %v312
        %315 = vrot.lane.b32.xlu0 %v305, 125
        %v316 = vpop.permute.xlu0 %315
        %v318 = vadd.f32 %v314, %v316
        %v319 = vld [vmem:[%s201] sm:$0x3]
        %321 = vrot.lane.b32.xlu0 %v319, 19
        %v322 = vpop.permute.xlu0 %321
        %vm324 = vcmask 279704
        %325 = vst.msk [vmem:[#allocation2] sm:$0x3] %vm324, %v322
        %v326 = vld [vmem:[%s201] sm:$0x3]
        %328 = vrot.lane.b32.xlu0 %v326, 21
        %v329 = vpop.permute.xlu0 %328
        %vm331 = vcmask 427304
        %332 = vst.msk [vmem:[#allocation2] sm:$0x3] %vm331, %v329
        %v333 = vld [vmem:[%s201] sm:$0x3]
        %335 = vrot.lane.b32.xlu0 %v333, 23
        %v336 = vpop.permute.xlu0 %335
        %vm338 = vcmask 574904
        %339 = vst.msk [vmem:[#allocation2] sm:$0x3] %vm338, %v336
        %v340 = vld [vmem:[%s201] sm:$0x3]
        %342 = vrot.lane.b32.xlu0 %v340, 25
        %v343 = vpop.permute.xlu0 %342
        %vm345 = vcmask 722504
        %346 = vst.msk [vmem:[#allocation2] sm:$0x3] %vm345, %v343
        %v347 = vld [vmem:[%s201] sm:$0x3]
        %349 = vrot.lane.b32.xlu0 %v347, 27
        %v350 = vpop.permute.xlu0 %349
        %vm352 = vcmask 870104
        %353 = vst.msk [vmem:[#allocation2] sm:$0x3] %vm352, %v350
        %v354 = vld [vmem:[%s201] sm:$0x3]
        %356 = vrot.lane.b32.xlu0 %v354, 29
        %v357 = vpop.permute.xlu0 %356
        %vm359 = vcmask 1017704
        %360 = vst.msk [vmem:[#allocation2] sm:$0x3] %vm359, %v357
        %v361 = vld [vmem:[%s201] sm:$0x3]
        %363 = vrot.lane.b32.xlu0 %v361, 31
        %v364 = vpop.permute.xlu0 %363
        %v365 = vrot.slane %v364, 6
        %vm366 = vcmask 252928
        %v367 = vsel %vm366, %v365, %v364
        %vm369 = vcmask 1042424
        %vm370 = vcmask 117762
        %vm371 = vmor %vm370, %vm369
        %372 = vst.msk [vmem:[#allocation2] sm:$0xf] %vm371, %v367
        %v373 = vld [vmem:[%s201] sm:$0x3]
        %375 = vrot.lane.b32.xlu0 %v373, 33
        %v376 = vpop.permute.xlu0 %375
        %vm378 = vcmask 263304
        %379 = vst.msk [vmem:[#allocation2 + $0x2] sm:$0x3] %vm378, %v376
        %v380 = vld [vmem:[%s201 + $0x2] sm:$0x3]
        %382 = vrot.lane.b32.xlu0 %v380, 35
        %v383 = vpop.permute.xlu0 %382
        %vm385 = vcmask 410904
        %386 = vst.msk [vmem:[#allocation2 + $0x2] sm:$0x3] %vm385, %v383
        %v387 = vld [vmem:[%s201 + $0x2] sm:$0x3]
        %389 = vrot.lane.b32.xlu0 %v387, 37
        %v390 = vpop.permute.xlu0 %389
        %vm392 = vcmask 558504
        %393 = vst.msk [vmem:[#allocation2 + $0x2] sm:$0x3] %vm392, %v390
        %v394 = vld [vmem:[%s201 + $0x2] sm:$0x3]
        %396 = vrot.lane.b32.xlu0 %v394, 39
        %v397 = vpop.permute.xlu0 %396
        %vm399 = vcmask 706104
        %400 = vst.msk [vmem:[#allocation2 + $0x2] sm:$0x3] %vm399, %v397
        %v401 = vld [vmem:[%s201 + $0x2] sm:$0x3]
        %403 = vrot.lane.b32.xlu0 %v401, 41
        %v404 = vpop.permute.xlu0 %403
        %vm406 = vcmask 853704
        %407 = vst.msk [vmem:[#allocation2 + $0x2] sm:$0x3] %vm406, %v404
        %v408 = vld [vmem:[%s201 + $0x2] sm:$0x3]
        %410 = vrot.lane.b32.xlu0 %v408, 43
        %v411 = vpop.permute.xlu0 %410
        %vm413 = vcmask 1001304
        %414 = vst.msk [vmem:[#allocation2 + $0x2] sm:$0x3] %vm413, %v411
        %v415 = vld [vmem:[%s201 + $0x2] sm:$0x3]
        %417 = vrot.lane.b32.xlu0 %v415, 45
        %v418 = vpop.permute.xlu0 %417
        %v419 = vrot.slane %v418, 6
        %vm420 = vcmask 367616
        %v421 = vsel %vm420, %v419, %v418
        %vm423 = vcmask 1042408
        %vm424 = vcmask 101378
        %vm425 = vmor %vm424, %vm423
        %426 = vst.msk [vmem:[#allocation2 + $0x2] sm:$0xf] %vm425, %v421
        %v427 = vld [vmem:[%s201 + $0x2] sm:$0x3]
        %429 = vrot.lane.b32.xlu0 %v427, 47
        %v430 = vpop.permute.xlu0 %429
        %vm432 = vcmask 246904
        %433 = vst.msk [vmem:[#allocation2 + $0x4] sm:$0x3] %vm432, %v430
        %v434 = vld [vmem:[%s201 + $0x2] sm:$0x3]
        %436 = vrot.lane.b32.xlu0 %v434, 49
        %v437 = vpop.permute.xlu0 %436
        %vm439 = vcmask 394504
        %440 = vst.msk [vmem:[#allocation2 + $0x4] sm:$0x3] %vm439, %v437
        %v441 = vld [vmem:[#allocation2] sm:$0x3f]
        %v443 = vcombine.high %v441, %v441
        %v445 = vunpack.c.l.s4 1983009808
        %v446 = vunpack.c.0.s8 %v445
        %v447 = vlaneseq
        %v448 = vshrl.u32 %v447, 7
        %v449 = vsub.s32 %v446, %v448
        %v450 = vrot.slane %v441, %v449
        %v452 = vunpack.c.l.s4 1983009808
        %v453 = vunpack.c.0.s8 %v452
        %v454 = vlaneseq
        %v455 = vshrl.u32 %v454, 7
        %v456 = vsub.s32 %v453, %v455
        %v457 = vrot.slane %v443, %v456
        %460 = vst [vmem:[#allocation3] sm:$0x33] %v450
        %461 = vst [vmem:[#allocation3 + $0x8] sm:$0x3] %v457
        %v462 = vld [vmem:[#allocation2] sm:$0xff]
        %v464 = vcombine.low %v462, %v462
        %v466 = vunpack.c.l.s4 1983009808
        %v467 = vunpack.c.0.s8 %v466
        %v468 = vlaneseq
        %v469 = vshrl.u32 %v468, 7
        %v470 = vsub.s32 %v467, %v469
        %v471 = vrot.slane %v464, %v470
        %v473 = vunpack.c.l.s4 1983009808
        %v474 = vunpack.c.0.s8 %v473
        %v475 = vlaneseq
        %v476 = vshrl.u32 %v475, 7
        %v477 = vsub.s32 %v474, %v476
        %v478 = vrot.slane %v462, %v477
        %479 = vrot.lane.b32.xlu0 %v471, 127
        %v480 = vpop.permute.xlu0 %479
        %481 = vrot.lane.b32.xlu0 %v478, 127
        %v482 = vpop.permute.xlu0 %481
        %v483 = vrot.slane %v480, 4
        %v484 = vrot.slane %v482, 4
        %vm485 = vcmask 1043456
        %v486 = vsel %vm485, %v483, %v484
        %vm487 = vcmask 1039360
        %v488 = vsel %vm487, %v480, %v486
        %v489 = vsel %vm487, %v482, %v484
        %492 = vst [vmem:[#allocation3] sm:$0xcc] %v488
        %493 = vst [vmem:[#allocation3 + $0x8] sm:$0xc] %v489
        %v494 = vld [vmem:[#allocation2] sm:$0xff]
        %v496 = vcombine.high %v494, %v494
        %v498 = vunpack.c.l.s4 1983009808
        %v499 = vunpack.c.0.s8 %v498
        %v500 = vlaneseq
        %v501 = vshrl.u32 %v500, 7
        %v502 = vsub.s32 %v499, %v501
        %v503 = vrot.slane %v494, %v502
        %v505 = vunpack.c.l.s4 1983009808
        %v506 = vunpack.c.0.s8 %v505
        %v507 = vlaneseq
        %v508 = vshrl.u32 %v507, 7
        %v509 = vsub.s32 %v506, %v508
        %v510 = vrot.slane %v496, %v509
        %511 = vrot.lane.b32.xlu0 %v503, 126
        %v512 = vpop.permute.xlu0 %511
        %513 = vrot.lane.b32.xlu0 %v510, 126
        %v514 = vpop.permute.xlu0 %513
        %v515 = vrot.slane %v512, 4
        %v516 = vrot.slane %v514, 4
        %v517 = vsel %vm485, %v515, %v516
        %vm518 = vcmask 1031168
        %v519 = vsel %vm518, %v512, %v517
        %v520 = vsel %vm518, %v514, %v516
        %523 = vst [vmem:[#allocation3 + $0xc] sm:$0x33] %v519
        %524 = vst [vmem:[#allocation3 + $0x14] sm:$0x3] %v520
        %v525 = vld [vmem:[#allocation2] sm:$0xff]
        %v527 = vcombine.low %v525, %v525
        %v529 = vunpack.c.l.s4 1983009808
        %v530 = vunpack.c.0.s8 %v529
        %v531 = vlaneseq
        %v532 = vshrl.u32 %v531, 7
        %v533 = vsub.s32 %v530, %v532
        %v534 = vrot.slane %v527, %v533
        %v536 = vunpack.c.l.s4 1983009808
        %v537 = vunpack.c.0.s8 %v536
        %v538 = vlaneseq
        %v539 = vshrl.u32 %v538, 7
        %v540 = vsub.s32 %v537, %v539
        %v541 = vrot.slane %v525, %v540
        %542 = vrot.lane.b32.xlu0 %v534, 110
        %v543 = vpop.permute.xlu0 %542
        %544 = vrot.lane.b32.xlu0 %v541, 110
        %v545 = vpop.permute.xlu0 %544
        %v546 = vrot.slane %v543, 4
        %v547 = vrot.slane %v545, 4
        %v548 = vsel %vm485, %v546, %v547
        %vm549 = vcmask 900096
        %v550 = vsel %vm549, %v543, %v548
        %v551 = vsel %vm549, %v545, %v547
        %554 = vst [vmem:[#allocation3 + $0xc] sm:$0xcc] %v550
        %555 = vst [vmem:[#allocation3 + $0x14] sm:$0xc] %v551
        %v556 = vld [vmem:[#allocation2] sm:$0xff]
        %v558 = vcombine.high %v556, %v556
        %v560 = vunpack.c.l.s4 1983009808
        %v561 = vunpack.c.0.s8 %v560
        %v562 = vlaneseq
        %v563 = vshrl.u32 %v562, 7
        %v564 = vsub.s32 %v561, %v563
        %v565 = vrot.slane %v556, %v564
        %v567 = vunpack.c.l.s4 1983009808
        %v568 = vunpack.c.0.s8 %v567
        %v569 = vlaneseq
        %v570 = vshrl.u32 %v569, 7
        %v571 = vsub.s32 %v568, %v570
        %v572 = vrot.slane %v558, %v571
        %573 = vrot.lane.b32.xlu0 %v565, 109
        %v574 = vpop.permute.xlu0 %573
        %575 = vrot.lane.b32.xlu0 %v572, 109
        %v576 = vpop.permute.xlu0 %575
        %v577 = vrot.slane %v574, 4
        %v578 = vrot.slane %v576, 4
        %v579 = vsel %vm485, %v577, %v578
        %vm580 = vcmask 891904
        %v581 = vsel %vm580, %v574, %v579
        %v582 = vsel %vm580, %v576, %v578
        %585 = vst [vmem:[#allocation3 + $0x18] sm:$0x33] %v581
        %586 = vst [vmem:[#allocation3 + $0x20] sm:$0x3] %v582
        %v587 = vld [vmem:[#allocation2] sm:$0xff]
        %v589 = vcombine.low %v587, %v587
        %v591 = vunpack.c.l.s4 1983009808
        %v592 = vunpack.c.0.s8 %v591
        %v593 = vlaneseq
        %v594 = vshrl.u32 %v593, 7
        %v595 = vsub.s32 %v592, %v594
        %v596 = vrot.slane %v589, %v595
        %v598 = vunpack.c.l.s4 1983009808
        %v599 = vunpack.c.0.s8 %v598
        %v600 = vlaneseq
        %v601 = vshrl.u32 %v600, 7
        %v602 = vsub.s32 %v599, %v601
        %v603 = vrot.slane %v587, %v602
        %604 = vrot.lane.b32.xlu0 %v596, 108
        %v605 = vpop.permute.xlu0 %604
        %606 = vrot.lane.b32.xlu0 %v603, 108
        %v607 = vpop.permute.xlu0 %606
        %v608 = vrot.slane %v605, 4
        %v609 = vrot.slane %v607, 4
        %v610 = vsel %vm485, %v608, %v609
        %vm611 = vcmask 883712
        %v612 = vsel %vm611, %v605, %v610
        %v613 = vsel %vm611, %v607, %v609
        %616 = vst [vmem:[#allocation3 + $0x18] sm:$0xcc] %v612
        %617 = vst [vmem:[#allocation3 + $0x20] sm:$0xc] %v613
        %v618 = vld [vmem:[#allocation2] sm:$0xff]
        %v620 = vcombine.high %v618, %v618
        %v622 = vunpack.c.l.s4 1983009808
        %v623 = vunpack.c.0.s8 %v622
        %v624 = vlaneseq
        %v625 = vshrl.u32 %v624, 7
        %v626 = vsub.s32 %v623, %v625
        %v627 = vrot.slane %v618, %v626
        %v629 = vunpack.c.l.s4 1983009808
        %v630 = vunpack.c.0.s8 %v629
        %v631 = vlaneseq
        %v632 = vshrl.u32 %v631, 7
        %v633 = vsub.s32 %v630, %v632
        %v634 = vrot.slane %v620, %v633
        %635 = vrot.lane.b32.xlu0 %v627, 92
        %v636 = vpop.permute.xlu0 %635
        %637 = vrot.lane.b32.xlu0 %v634, 92
        %v638 = vpop.permute.xlu0 %637
        %v639 = vrot.slane %v636, 4
        %v640 = vrot.slane %v638, 4
        %v641 = vsel %vm485, %v639, %v640
        %vm642 = vcmask 752640
        %v643 = vsel %vm642, %v636, %v641
        %v644 = vsel %vm642, %v638, %v640
        %647 = vst [vmem:[#allocation3 + $0x24] sm:$0x33] %v643
        %648 = vst [vmem:[#allocation3 + $0x2c] sm:$0x3] %v644
        %v649 = vld [vmem:[#allocation2] sm:$0xff]
        %v651 = vcombine.low %v649, %v649
        %v653 = vunpack.c.l.s4 1983009808
        %v654 = vunpack.c.0.s8 %v653
        %v655 = vlaneseq
        %v656 = vshrl.u32 %v655, 7
        %v657 = vsub.s32 %v654, %v656
        %v658 = vrot.slane %v651, %v657
        %v660 = vunpack.c.l.s4 1983009808
        %v661 = vunpack.c.0.s8 %v660
        %v662 = vlaneseq
        %v663 = vshrl.u32 %v662, 7
        %v664 = vsub.s32 %v661, %v663
        %v665 = vrot.slane %v649, %v664
        %666 = vrot.lane.b32.xlu0 %v658, 91
        %v667 = vpop.permute.xlu0 %666
        %668 = vrot.lane.b32.xlu0 %v665, 91
        %v669 = vpop.permute.xlu0 %668
        %v670 = vrot.slane %v667, 4
        %v671 = vrot.slane %v669, 4
        %v672 = vsel %vm485, %v670, %v671
        %vm673 = vcmask 744448
        %v674 = vsel %vm673, %v667, %v672
        %v675 = vsel %vm673, %v669, %v671
        %678 = vst [vmem:[#allocation3 + $0x24] sm:$0xcc] %v674
        %679 = vst [vmem:[#allocation3 + $0x2c] sm:$0xc] %v675
        %v680 = vld [vmem:[#allocation2] sm:$0xff]
        %v682 = vcombine.high %v680, %v680
        %v684 = vunpack.c.l.s4 1983009808
        %v685 = vunpack.c.0.s8 %v684
        %v686 = vlaneseq
        %v687 = vshrl.u32 %v686, 7
        %v688 = vsub.s32 %v685, %v687
        %v689 = vrot.slane %v680, %v688
        %v691 = vunpack.c.l.s4 1983009808
        %v692 = vunpack.c.0.s8 %v691
        %v693 = vlaneseq
        %v694 = vshrl.u32 %v693, 7
        %v695 = vsub.s32 %v692, %v694
        %v696 = vrot.slane %v682, %v695
        %697 = vrot.lane.b32.xlu0 %v689, 90
        %v698 = vpop.permute.xlu0 %697
        %699 = vrot.lane.b32.xlu0 %v696, 90
        %v700 = vpop.permute.xlu0 %699
        %v701 = vrot.slane %v698, 4
        %v702 = vrot.slane %v700, 4
        %v703 = vsel %vm485, %v701, %v702
        %vm704 = vcmask 736256
        %v705 = vsel %vm704, %v698, %v703
        %v706 = vsel %vm704, %v700, %v702
        %709 = vst [vmem:[#allocation3 + $0x30] sm:$0x33] %v705
        %710 = vst [vmem:[#allocation3 + $0x38] sm:$0x3] %v706
        %v711 = vpack.c.bf16 %v303, %v303
        %v712 = vld [vmem:[#allocation3] sm:$0xff]
        %v713 = vld [vmem:[#allocation3 + $0x8] sm:$0xf]
        %v714 = vld [vmem:[#allocation3 + $0xc] sm:$0xff]
        %v715 = vld [vmem:[#allocation3 + $0x14] sm:$0xf]
        %v716 = vld [vmem:[#allocation3 + $0x18] sm:$0xff]
        %v717 = vld [vmem:[#allocation3 + $0x20] sm:$0xf]
        %v718 = vld [vmem:[#allocation3 + $0x24] sm:$0xff]
        %v719 = vld [vmem:[#allocation3 + $0x2c] sm:$0xf]
        %v720 = vld [vmem:[#allocation3 + $0x30] sm:$0x33]
        %v721 = vld [vmem:[#allocation3 + $0x38] sm:$0x3]
        %723 = vset.pattern.permute.xlu0 0
        %724 = vperm.xlu0 %723, %v318
        %v725 = vpop.permute.xlu0 %724
        %v737 = vunpack.c.l.b16 %v712
        %v738 = vunpack.c.h.b16 %v712
        %v739 = vunpack.c.l.b16 %v713
        %v740 = vunpack.c.l.b16 %v714
        %v741 = vunpack.c.h.b16 %v714
        %v742 = vunpack.c.l.b16 %v715
        %v743 = vunpack.c.l.b16 %v716
        %v744 = vunpack.c.h.b16 %v716
        %v745 = vunpack.c.l.b16 %v717
        %v746 = vunpack.c.l.b16 %v718
        %v747 = vunpack.c.h.b16 %v718
        %v748 = vunpack.c.l.b16 %v719
        %v749 = vunpack.c.l.b16 %v720
        %v750 = vunpack.c.h.b16 %v720
        %v751 = vunpack.c.l.b16 %v721
        %v752 = vpack.c.b16 %v740, %v737
        %v753 = vpack.c.b16 %v741, %v738
        %v754 = vpack.c.b16 %v742, %v739
        %v755 = vpack.c.b16 %v746, %v743
        %v756 = vpack.c.b16 %v747, %v744
        %v757 = vpack.c.b16 %v748, %v745
        %v758 = vpack.c.b16 %v749, %v749
        %v759 = vpack.c.b16 %v750, %v750
        %v760 = vpack.c.b16 %v751, %v751
        %vm767 = vcmask 293888
        %v769 = vsel %vm767, %v711, 0
        %v772 = vsel %vm233, %v758, 0
        %v775 = vsel %vm233, %v759, 0
        %v778 = vsel %vm233, %v760, 0
        %780 = vmatprep.subr.bf16.mxu0 %v753
        %781 = vmatpush1.bf16.msra.mxu0 %v752
        %782 = vmatprep.subr.bf16.mxu0 %v756
        %783 = vmatpush1.bf16.msra.mxu0 %v755
        %784 = vmatprep.subr.bf16.mxu0 %v775
        %785 = vmatpush1.bf16.msra.mxu0 %v772
        %786 = vmatprep.subr.bf16.mxu0 0
        %787 = vmatpush1.bf16.msra.mxu0 0
        %788 = vmatprep.subr.bf16.mxu0 0
        %789 = vmatpush1.bf16.msra.mxu0 0
        %790 = vmatprep.subr.bf16.mxu0 0
        %791 = vmatpush1.bf16.msra.mxu0 0
        %792 = vmatprep.subr.bf16.mxu0 0
        %793 = vmatpush1.bf16.msra.mxu0 0
        %794 = vmatprep.subr.bf16.mxu0 0
        %795 = vmatpush1.bf16.msra.mxu0 0
        %796 = vmatprep.subr.bf16.mxu0 0
        %797 = vmatpush1.bf16.msra.mxu0 0
        %798 = vmatprep.subr.bf16.mxu0 0
        %799 = vmatpush1.bf16.msra.mxu0 0
        %800 = vmatprep.subr.bf16.mxu0 0
        %801 = vmatpush1.bf16.msra.mxu0 0
        %802 = vmatprep.subr.bf16.mxu0 0
        %803 = vmatpush1.bf16.msra.mxu0 0
        %804 = vmatprep.subr.bf16.mxu0 0
        %805 = vmatpush1.bf16.msra.mxu0 0
        %806 = vmatprep.subr.bf16.mxu0 0
        %807 = vmatpush1.bf16.msra.mxu0 0
        %808 = vmatprep.subr.bf16.mxu0 0
        %809 = vmatpush1.bf16.msra.mxu0 0
        %810 = vmatprep.subr.bf16.mxu0 0
        %811 = vmatpush1.bf16.msra.mxu0 0
        %812 = vmatprep.mubr.bf16.mxu0 0
        %813 = vmatmul.mubr.bf16.gmra.mrb[0].mxu0 %v769
        %v814 = vpop.f32.mrb[0].mxu0
        %v815 = vadd.f32 %v725, %v814
        %v816 = vpop.f32.mrb[0].mxu0
        %v817 = vadd.f32 %v725, %v816
        %v818 = vpop.f32.mrb[0].mxu0
        %v819 = vpop.f32.mrb[0].mxu0
        %820 = vdwg.mxu0
        %821 = vmatprep.subr.bf16.mxu0 0
        %822 = vmatpush1.bf16.msra.mxu0 %v754
        %823 = vmatprep.subr.bf16.mxu0 0
        %824 = vmatpush1.bf16.msra.mxu0 %v757
        %825 = vmatprep.subr.bf16.mxu0 0
        %826 = vmatpush1.bf16.msra.mxu0 %v778
        %827 = vmatprep.subr.bf16.mxu0 0
        %828 = vmatpush1.bf16.msra.mxu0 0
        %829 = vmatprep.subr.bf16.mxu0 0
        %830 = vmatpush1.bf16.msra.mxu0 0
        %831 = vmatprep.subr.bf16.mxu0 0
        %832 = vmatpush1.bf16.msra.mxu0 0
        %833 = vmatprep.subr.bf16.mxu0 0
        %834 = vmatpush1.bf16.msra.mxu0 0
        %835 = vmatprep.subr.bf16.mxu0 0
        %836 = vmatpush1.bf16.msra.mxu0 0
        %837 = vmatprep.subr.bf16.mxu0 0
        %838 = vmatpush1.bf16.msra.mxu0 0
        %839 = vmatprep.subr.bf16.mxu0 0
        %840 = vmatpush1.bf16.msra.mxu0 0
        %841 = vmatprep.subr.bf16.mxu0 0
        %842 = vmatpush1.bf16.msra.mxu0 0
        %843 = vmatprep.subr.bf16.mxu0 0
        %844 = vmatpush1.bf16.msra.mxu0 0
        %845 = vmatprep.subr.bf16.mxu0 0
        %846 = vmatpush1.bf16.msra.mxu0 0
        %847 = vmatprep.subr.bf16.mxu0 0
        %848 = vmatpush1.bf16.msra.mxu0 0
        %849 = vmatprep.subr.bf16.mxu0 0
        %850 = vmatpush1.bf16.msra.mxu0 0
        %851 = vmatprep.subr.bf16.mxu0 0
        %852 = vmatpush1.bf16.msra.mxu0 0
        %853 = vmatprep.mubr.bf16.mxu0 0
        %854 = vmatmul.mubr.bf16.gmra.mrb[0].mxu0 %v769
        %v855 = vpop.f32.mrb[0].mxu0
        %v856 = vadd.f32 %v725, %v855
        %v857 = vpop.f32.mrb[0].mxu0
        %v858 = vpop.f32.mrb[0].mxu0
        %v859 = vpop.f32.mrb[0].mxu0
        %860 = vdwg.mxu0
        %861 = vst [vmem:[%s229] sm:$0xff] %v815
        %862 = vst [vmem:[%s229 + $0x8] sm:$0xff] %v817
        %863 = vst [vmem:[%s229 + $0x10] sm:$0xff] %v856
        %s864 = scalar_lea.vmem %s201, 4 [#allocation4]
        %v865 = vld [vmem:[%s864] sm:$0xf]
        %v866 = vunpack.c.l.bf16 %v865
        %v868 = vcombine.high %v866, %v866
        %v870 = vsel %vm246, %v866, 0.0
        %v871 = vsel %vm246, %v868, 0.0
        %v872 = vadd.f32 %v870, %v871
        %873 = vadd.xlane.f32.xlu0 %v872
        %v874 = vpop.xlane.xlu0 %873
        %v875 = vmul.f32 %v874, 0.00390625
        %v876 = vld [vmem:[#allocation7] sm:$0xf]
        %v877 = vmul.f32 %v875, %v876
        %v878 = vsel %vm255, %v877, 0.0
        %v879 = vrot.slane %v878, 4
        %v880 = vadd.f32 %v878, %v879
        %v881 = vrot.slane %v880, 2
        %v882 = vadd.f32 %v880, %v881
        %v883 = vrot.slane %v882, 1
        %v884 = vadd.f32 %v882, %v883
        %v885 = vxor.u32 %v884, 2147483648
        %v886 = vmul.f32 %v885, 1.442695
        %v887 = vpow.pop %v886
        %v888 = vadd.f32 %v887, 1.0
        %v889 = vrcp.pop %v888
        %v890 = vmul.f32 1.0, %v889
        %v891 = vld [vmem:[%s2] sm:$0xf]
        %v892 = vunpack.c.l.bf16 %v891
        %894 = vset.pattern.permute.xlu0 0
        %895 = vperm.xlu0 %894, %v890
        %v896 = vpop.permute.xlu0 %895
        %v898 = vmul.f32 %v896, %v892
        %v899 = vld [vmem:[%s277] sm:$0xf]
        %v900 = vunpack.c.l.bf16 %v899
        %901 = vset.pattern.permute.xlu0 1
        %902 = vperm.xlu0 %901, %v890
        %v903 = vpop.permute.xlu0 %902
        %v905 = vmul.f32 %v903, %v900
        %v906 = vadd.f32 %v898, %v905
        %v907 = vld [vmem:[%s286] sm:$0xf]
        %v908 = vunpack.c.l.bf16 %v907
        %909 = vset.pattern.permute.xlu0 2
        %910 = vperm.xlu0 %909, %v890
        %v911 = vpop.permute.xlu0 %910
        %v913 = vmul.f32 %v911, %v908
        %v914 = vadd.f32 %v906, %v913
        %v915 = vld [vmem:[%s295] sm:$0xf]
        %v916 = vunpack.c.l.bf16 %v915
        %917 = vset.pattern.permute.xlu0 3
        %918 = vperm.xlu0 %917, %v890
        %v919 = vpop.permute.xlu0 %918
        %v921 = vmul.f32 %v919, %v916
        %v922 = vadd.f32 %v914, %v921
        %v923 = vld [vmem:[%s3] sm:$0xff]
        %v924 = vmul.f32 %v890, %v923
        %926 = vrot.lane.b32.xlu0 %v924, 127
        %v927 = vpop.permute.xlu0 %926
        %v929 = vadd.f32 %v924, %v927
        %930 = vrot.lane.b32.xlu0 %v924, 126
        %v931 = vpop.permute.xlu0 %930
        %v933 = vadd.f32 %v929, %v931
        %934 = vrot.lane.b32.xlu0 %v924, 125
        %v935 = vpop.permute.xlu0 %934
        %v937 = vadd.f32 %v933, %v935
        %v938 = vld [vmem:[%s864] sm:$0x3]
        %940 = vrot.lane.b32.xlu0 %v938, 19
        %v941 = vpop.permute.xlu0 %940
        %943 = vst.msk [vmem:[#allocation2] sm:$0x3] %vm324, %v941
        %v944 = vld [vmem:[%s864] sm:$0x3]
        %946 = vrot.lane.b32.xlu0 %v944, 21
        %v947 = vpop.permute.xlu0 %946
        %949 = vst.msk [vmem:[#allocation2] sm:$0x3] %vm331, %v947
        %v950 = vld [vmem:[%s864] sm:$0x3]
        %952 = vrot.lane.b32.xlu0 %v950, 23
        %v953 = vpop.permute.xlu0 %952
        %955 = vst.msk [vmem:[#allocation2] sm:$0x3] %vm338, %v953
        %v956 = vld [vmem:[%s864] sm:$0x3]
        %958 = vrot.lane.b32.xlu0 %v956, 25
        %v959 = vpop.permute.xlu0 %958
        %961 = vst.msk [vmem:[#allocation2] sm:$0x3] %vm345, %v959
        %v962 = vld [vmem:[%s864] sm:$0x3]
        %964 = vrot.lane.b32.xlu0 %v962, 27
        %v965 = vpop.permute.xlu0 %964
        %967 = vst.msk [vmem:[#allocation2] sm:$0x3] %vm352, %v965
        %v968 = vld [vmem:[%s864] sm:$0x3]
        %970 = vrot.lane.b32.xlu0 %v968, 29
        %v971 = vpop.permute.xlu0 %970
        %973 = vst.msk [vmem:[#allocation2] sm:$0x3] %vm359, %v971
        %v974 = vld [vmem:[%s864] sm:$0x3]
        %976 = vrot.lane.b32.xlu0 %v974, 31
        %v977 = vpop.permute.xlu0 %976
        %v978 = vrot.slane %v977, 6
        %v979 = vsel %vm366, %v978, %v977
        %981 = vst.msk [vmem:[#allocation2] sm:$0xf] %vm371, %v979
        %v982 = vld [vmem:[%s864] sm:$0x3]
        %984 = vrot.lane.b32.xlu0 %v982, 33
        %v985 = vpop.permute.xlu0 %984
        %987 = vst.msk [vmem:[#allocation2 + $0x2] sm:$0x3] %vm378, %v985
        %v988 = vld [vmem:[%s864 + $0x2] sm:$0x3]
        %990 = vrot.lane.b32.xlu0 %v988, 35
        %v991 = vpop.permute.xlu0 %990
        %993 = vst.msk [vmem:[#allocation2 + $0x2] sm:$0x3] %vm385, %v991
        %v994 = vld [vmem:[%s864 + $0x2] sm:$0x3]
        %996 = vrot.lane.b32.xlu0 %v994, 37
        %v997 = vpop.permute.xlu0 %996
        %999 = vst.msk [vmem:[#allocation2 + $0x2] sm:$0x3] %vm392, %v997
        %v1000 = vld [vmem:[%s864 + $0x2] sm:$0x3]
        %1002 = vrot.lane.b32.xlu0 %v1000, 39
        %v1003 = vpop.permute.xlu0 %1002
        %1005 = vst.msk [vmem:[#allocation2 + $0x2] sm:$0x3] %vm399, %v1003
        %v1006 = vld [vmem:[%s864 + $0x2] sm:$0x3]
        %1008 = vrot.lane.b32.xlu0 %v1006, 41
        %v1009 = vpop.permute.xlu0 %1008
        %1011 = vst.msk [vmem:[#allocation2 + $0x2] sm:$0x3] %vm406, %v1009
        %v1012 = vld [vmem:[%s864 + $0x2] sm:$0x3]
        %1014 = vrot.lane.b32.xlu0 %v1012, 43
        %v1015 = vpop.permute.xlu0 %1014
        %1017 = vst.msk [vmem:[#allocation2 + $0x2] sm:$0x3] %vm413, %v1015
        %v1018 = vld [vmem:[%s864 + $0x2] sm:$0x3]
        %1020 = vrot.lane.b32.xlu0 %v1018, 45
        %v1021 = vpop.permute.xlu0 %1020
        %v1022 = vrot.slane %v1021, 6
        %v1023 = vsel %vm420, %v1022, %v1021
        %1025 = vst.msk [vmem:[#allocation2 + $0x2] sm:$0xf] %vm425, %v1023
        %v1026 = vld [vmem:[%s864 + $0x2] sm:$0x3]
        %1028 = vrot.lane.b32.xlu0 %v1026, 47
        %v1029 = vpop.permute.xlu0 %1028
        %1031 = vst.msk [vmem:[#allocation2 + $0x4] sm:$0x3] %vm432, %v1029
        %v1032 = vld [vmem:[%s864 + $0x2] sm:$0x3]
        %1034 = vrot.lane.b32.xlu0 %v1032, 49
        %v1035 = vpop.permute.xlu0 %1034
        %1037 = vst.msk [vmem:[#allocation2 + $0x4] sm:$0x3] %vm439, %v1035
        %v1038 = vld [vmem:[#allocation2] sm:$0x3f]
        %v1040 = vcombine.high %v1038, %v1038
        %v1042 = vunpack.c.l.s4 1983009808
        %v1043 = vunpack.c.0.s8 %v1042
        %v1044 = vlaneseq
        %v1045 = vshrl.u32 %v1044, 7
        %v1046 = vsub.s32 %v1043, %v1045
        %v1047 = vrot.slane %v1038, %v1046
        %v1049 = vunpack.c.l.s4 1983009808
        %v1050 = vunpack.c.0.s8 %v1049
        %v1051 = vlaneseq
        %v1052 = vshrl.u32 %v1051, 7
        %v1053 = vsub.s32 %v1050, %v1052
        %v1054 = vrot.slane %v1040, %v1053
        %1057 = vst [vmem:[#allocation3] sm:$0x33] %v1047
        %1058 = vst [vmem:[#allocation3 + $0x8] sm:$0x3] %v1054
        %v1059 = vld [vmem:[#allocation2] sm:$0xff]
        %v1061 = vcombine.low %v1059, %v1059
        %v1063 = vunpack.c.l.s4 1983009808
        %v1064 = vunpack.c.0.s8 %v1063
        %v1065 = vlaneseq
        %v1066 = vshrl.u32 %v1065, 7
        %v1067 = vsub.s32 %v1064, %v1066
        %v1068 = vrot.slane %v1061, %v1067
        %v1070 = vunpack.c.l.s4 1983009808
        %v1071 = vunpack.c.0.s8 %v1070
        %v1072 = vlaneseq
        %v1073 = vshrl.u32 %v1072, 7
        %v1074 = vsub.s32 %v1071, %v1073
        %v1075 = vrot.slane %v1059, %v1074
        %1076 = vrot.lane.b32.xlu0 %v1068, 127
        %v1077 = vpop.permute.xlu0 %1076
        %1078 = vrot.lane.b32.xlu0 %v1075, 127
        %v1079 = vpop.permute.xlu0 %1078
        %v1080 = vrot.slane %v1077, 4
        %v1081 = vrot.slane %v1079, 4
        %v1082 = vsel %vm485, %v1080, %v1081
        %v1083 = vsel %vm487, %v1077, %v1082
        %v1084 = vsel %vm487, %v1079, %v1081
        %1087 = vst [vmem:[#allocation3] sm:$0xcc] %v1083
        %1088 = vst [vmem:[#allocation3 + $0x8] sm:$0xc] %v1084
        %v1089 = vld [vmem:[#allocation2] sm:$0xff]
        %v1091 = vcombine.high %v1089, %v1089
        %v1093 = vunpack.c.l.s4 1983009808
        %v1094 = vunpack.c.0.s8 %v1093
        %v1095 = vlaneseq
        %v1096 = vshrl.u32 %v1095, 7
        %v1097 = vsub.s32 %v1094, %v1096
        %v1098 = vrot.slane %v1089, %v1097
        %v1100 = vunpack.c.l.s4 1983009808
        %v1101 = vunpack.c.0.s8 %v1100
        %v1102 = vlaneseq
        %v1103 = vshrl.u32 %v1102, 7
        %v1104 = vsub.s32 %v1101, %v1103
        %v1105 = vrot.slane %v1091, %v1104
        %1106 = vrot.lane.b32.xlu0 %v1098, 126
        %v1107 = vpop.permute.xlu0 %1106
        %1108 = vrot.lane.b32.xlu0 %v1105, 126
        %v1109 = vpop.permute.xlu0 %1108
        %v1110 = vrot.slane %v1107, 4
        %v1111 = vrot.slane %v1109, 4
        %v1112 = vsel %vm485, %v1110, %v1111
        %v1113 = vsel %vm518, %v1107, %v1112
        %v1114 = vsel %vm518, %v1109, %v1111
        %1117 = vst [vmem:[#allocation3 + $0xc] sm:$0x33] %v1113
        %1118 = vst [vmem:[#allocation3 + $0x14] sm:$0x3] %v1114
        %v1119 = vld [vmem:[#allocation2] sm:$0xff]
        %v1121 = vcombine.low %v1119, %v1119
        %v1123 = vunpack.c.l.s4 1983009808
        %v1124 = vunpack.c.0.s8 %v1123
        %v1125 = vlaneseq
        %v1126 = vshrl.u32 %v1125, 7
        %v1127 = vsub.s32 %v1124, %v1126
        %v1128 = vrot.slane %v1121, %v1127
        %v1130 = vunpack.c.l.s4 1983009808
        %v1131 = vunpack.c.0.s8 %v1130
        %v1132 = vlaneseq
        %v1133 = vshrl.u32 %v1132, 7
        %v1134 = vsub.s32 %v1131, %v1133
        %v1135 = vrot.slane %v1119, %v1134
        %1136 = vrot.lane.b32.xlu0 %v1128, 110
        %v1137 = vpop.permute.xlu0 %1136
        %1138 = vrot.lane.b32.xlu0 %v1135, 110
        %v1139 = vpop.permute.xlu0 %1138
        %v1140 = vrot.slane %v1137, 4
        %v1141 = vrot.slane %v1139, 4
        %v1142 = vsel %vm485, %v1140, %v1141
        %v1143 = vsel %vm549, %v1137, %v1142
        %v1144 = vsel %vm549, %v1139, %v1141
        %1147 = vst [vmem:[#allocation3 + $0xc] sm:$0xcc] %v1143
        %1148 = vst [vmem:[#allocation3 + $0x14] sm:$0xc] %v1144
        %v1149 = vld [vmem:[#allocation2] sm:$0xff]
        %v1151 = vcombine.high %v1149, %v1149
        %v1153 = vunpack.c.l.s4 1983009808
        %v1154 = vunpack.c.0.s8 %v1153
        %v1155 = vlaneseq
        %v1156 = vshrl.u32 %v1155, 7
        %v1157 = vsub.s32 %v1154, %v1156
        %v1158 = vrot.slane %v1149, %v1157
        %v1160 = vunpack.c.l.s4 1983009808
        %v1161 = vunpack.c.0.s8 %v1160
        %v1162 = vlaneseq
        %v1163 = vshrl.u32 %v1162, 7
        %v1164 = vsub.s32 %v1161, %v1163
        %v1165 = vrot.slane %v1151, %v1164
        %1166 = vrot.lane.b32.xlu0 %v1158, 109
        %v1167 = vpop.permute.xlu0 %1166
        %1168 = vrot.lane.b32.xlu0 %v1165, 109
        %v1169 = vpop.permute.xlu0 %1168
        %v1170 = vrot.slane %v1167, 4
        %v1171 = vrot.slane %v1169, 4
        %v1172 = vsel %vm485, %v1170, %v1171
        %v1173 = vsel %vm580, %v1167, %v1172
        %v1174 = vsel %vm580, %v1169, %v1171
        %1177 = vst [vmem:[#allocation3 + $0x18] sm:$0x33] %v1173
        %1178 = vst [vmem:[#allocation3 + $0x20] sm:$0x3] %v1174
        %v1179 = vld [vmem:[#allocation2] sm:$0xff]
        %v1181 = vcombine.low %v1179, %v1179
        %v1183 = vunpack.c.l.s4 1983009808
        %v1184 = vunpack.c.0.s8 %v1183
        %v1185 = vlaneseq
        %v1186 = vshrl.u32 %v1185, 7
        %v1187 = vsub.s32 %v1184, %v1186
        %v1188 = vrot.slane %v1181, %v1187
        %v1190 = vunpack.c.l.s4 1983009808
        %v1191 = vunpack.c.0.s8 %v1190
        %v1192 = vlaneseq
        %v1193 = vshrl.u32 %v1192, 7
        %v1194 = vsub.s32 %v1191, %v1193
        %v1195 = vrot.slane %v1179, %v1194
        %1196 = vrot.lane.b32.xlu0 %v1188, 108
        %v1197 = vpop.permute.xlu0 %1196
        %1198 = vrot.lane.b32.xlu0 %v1195, 108
        %v1199 = vpop.permute.xlu0 %1198
        %v1200 = vrot.slane %v1197, 4
        %v1201 = vrot.slane %v1199, 4
        %v1202 = vsel %vm485, %v1200, %v1201
        %v1203 = vsel %vm611, %v1197, %v1202
        %v1204 = vsel %vm611, %v1199, %v1201
        %1207 = vst [vmem:[#allocation3 + $0x18] sm:$0xcc] %v1203
        %1208 = vst [vmem:[#allocation3 + $0x20] sm:$0xc] %v1204
        %v1209 = vld [vmem:[#allocation2] sm:$0xff]
        %v1211 = vcombine.high %v1209, %v1209
        %v1213 = vunpack.c.l.s4 1983009808
        %v1214 = vunpack.c.0.s8 %v1213
        %v1215 = vlaneseq
        %v1216 = vshrl.u32 %v1215, 7
        %v1217 = vsub.s32 %v1214, %v1216
        %v1218 = vrot.slane %v1209, %v1217
        %v1220 = vunpack.c.l.s4 1983009808
        %v1221 = vunpack.c.0.s8 %v1220
        %v1222 = vlaneseq
        %v1223 = vshrl.u32 %v1222, 7
        %v1224 = vsub.s32 %v1221, %v1223
        %v1225 = vrot.slane %v1211, %v1224
        %1226 = vrot.lane.b32.xlu0 %v1218, 92
        %v1227 = vpop.permute.xlu0 %1226
        %1228 = vrot.lane.b32.xlu0 %v1225, 92
        %v1229 = vpop.permute.xlu0 %1228
        %v1230 = vrot.slane %v1227, 4
        %v1231 = vrot.slane %v1229, 4
        %v1232 = vsel %vm485, %v1230, %v1231
        %v1233 = vsel %vm642, %v1227, %v1232
        %v1234 = vsel %vm642, %v1229, %v1231
        %1237 = vst [vmem:[#allocation3 + $0x24] sm:$0x33] %v1233
        %1238 = vst [vmem:[#allocation3 + $0x2c] sm:$0x3] %v1234
        %v1239 = vld [vmem:[#allocation2] sm:$0xff]
        %v1241 = vcombine.low %v1239, %v1239
        %v1243 = vunpack.c.l.s4 1983009808
        %v1244 = vunpack.c.0.s8 %v1243
        %v1245 = vlaneseq
        %v1246 = vshrl.u32 %v1245, 7
        %v1247 = vsub.s32 %v1244, %v1246
        %v1248 = vrot.slane %v1241, %v1247
        %v1250 = vunpack.c.l.s4 1983009808
        %v1251 = vunpack.c.0.s8 %v1250
        %v1252 = vlaneseq
        %v1253 = vshrl.u32 %v1252, 7
        %v1254 = vsub.s32 %v1251, %v1253
        %v1255 = vrot.slane %v1239, %v1254
        %1256 = vrot.lane.b32.xlu0 %v1248, 91
        %v1257 = vpop.permute.xlu0 %1256
        %1258 = vrot.lane.b32.xlu0 %v1255, 91
        %v1259 = vpop.permute.xlu0 %1258
        %v1260 = vrot.slane %v1257, 4
        %v1261 = vrot.slane %v1259, 4
        %v1262 = vsel %vm485, %v1260, %v1261
        %v1263 = vsel %vm673, %v1257, %v1262
        %v1264 = vsel %vm673, %v1259, %v1261
        %1267 = vst [vmem:[#allocation3 + $0x24] sm:$0xcc] %v1263
        %1268 = vst [vmem:[#allocation3 + $0x2c] sm:$0xc] %v1264
        %v1269 = vld [vmem:[#allocation2] sm:$0xff]
        %v1271 = vcombine.high %v1269, %v1269
        %v1273 = vunpack.c.l.s4 1983009808
        %v1274 = vunpack.c.0.s8 %v1273
        %v1275 = vlaneseq
        %v1276 = vshrl.u32 %v1275, 7
        %v1277 = vsub.s32 %v1274, %v1276
        %v1278 = vrot.slane %v1269, %v1277
        %v1280 = vunpack.c.l.s4 1983009808
        %v1281 = vunpack.c.0.s8 %v1280
        %v1282 = vlaneseq
        %v1283 = vshrl.u32 %v1282, 7
        %v1284 = vsub.s32 %v1281, %v1283
        %v1285 = vrot.slane %v1271, %v1284
        %1286 = vrot.lane.b32.xlu0 %v1278, 90
        %v1287 = vpop.permute.xlu0 %1286
        %1288 = vrot.lane.b32.xlu0 %v1285, 90
        %v1289 = vpop.permute.xlu0 %1288
        %v1290 = vrot.slane %v1287, 4
        %v1291 = vrot.slane %v1289, 4
        %v1292 = vsel %vm485, %v1290, %v1291
        %v1293 = vsel %vm704, %v1287, %v1292
        %v1294 = vsel %vm704, %v1289, %v1291
        %1297 = vst [vmem:[#allocation3 + $0x30] sm:$0x33] %v1293
        %1298 = vst [vmem:[#allocation3 + $0x38] sm:$0x3] %v1294
        %v1299 = vpack.c.bf16 %v922, %v922
        %v1300 = vld [vmem:[#allocation3] sm:$0xff]
        %v1301 = vld [vmem:[#allocation3 + $0x8] sm:$0xf]
        %v1302 = vld [vmem:[#allocation3 + $0xc] sm:$0xff]
        %v1303 = vld [vmem:[#allocation3 + $0x14] sm:$0xf]
        %v1304 = vld [vmem:[#allocation3 + $0x18] sm:$0xff]
        %v1305 = vld [vmem:[#allocation3 + $0x20] sm:$0xf]
        %v1306 = vld [vmem:[#allocation3 + $0x24] sm:$0xff]
        %v1307 = vld [vmem:[#allocation3 + $0x2c] sm:$0xf]
        %v1308 = vld [vmem:[#allocation3 + $0x30] sm:$0x33]
        %v1309 = vld [vmem:[#allocation3 + $0x38] sm:$0x3]
        %1311 = vset.pattern.permute.xlu0 0
        %1312 = vperm.xlu0 %1311, %v937
        %v1313 = vpop.permute.xlu0 %1312
        %v1325 = vunpack.c.l.b16 %v1300
        %v1326 = vunpack.c.h.b16 %v1300
        %v1327 = vunpack.c.l.b16 %v1301
        %v1328 = vunpack.c.l.b16 %v1302
        %v1329 = vunpack.c.h.b16 %v1302
        %v1330 = vunpack.c.l.b16 %v1303
        %v1331 = vunpack.c.l.b16 %v1304
        %v1332 = vunpack.c.h.b16 %v1304
        %v1333 = vunpack.c.l.b16 %v1305
        %v1334 = vunpack.c.l.b16 %v1306
        %v1335 = vunpack.c.h.b16 %v1306
        %v1336 = vunpack.c.l.b16 %v1307
        %v1337 = vunpack.c.l.b16 %v1308
        %v1338 = vunpack.c.h.b16 %v1308
        %v1339 = vunpack.c.l.b16 %v1309
        %v1340 = vpack.c.b16 %v1328, %v1325
        %v1341 = vpack.c.b16 %v1329, %v1326
        %v1342 = vpack.c.b16 %v1330, %v1327
        %v1343 = vpack.c.b16 %v1334, %v1331
        %v1344 = vpack.c.b16 %v1335, %v1332
        %v1345 = vpack.c.b16 %v1336, %v1333
        %v1346 = vpack.c.b16 %v1337, %v1337
        %v1347 = vpack.c.b16 %v1338, %v1338
        %v1348 = vpack.c.b16 %v1339, %v1339
        %v1356 = vsel %vm767, %v1299, 0
        %v1359 = vsel %vm233, %v1346, 0
        %v1362 = vsel %vm233, %v1347, 0
        %v1365 = vsel %vm233, %v1348, 0
        %1367 = vmatprep.subr.bf16.mxu0 %v1341
        %1368 = vmatpush1.bf16.msra.mxu0 %v1340
        %1369 = vmatprep.subr.bf16.mxu0 %v1344
        %1370 = vmatpush1.bf16.msra.mxu0 %v1343
        %1371 = vmatprep.subr.bf16.mxu0 %v1362
        %1372 = vmatpush1.bf16.msra.mxu0 %v1359
        %1373 = vmatprep.subr.bf16.mxu0 0
        %1374 = vmatpush1.bf16.msra.mxu0 0
        %1375 = vmatprep.subr.bf16.mxu0 0
        %1376 = vmatpush1.bf16.msra.mxu0 0
        %1377 = vmatprep.subr.bf16.mxu0 0
        %1378 = vmatpush1.bf16.msra.mxu0 0
        %1379 = vmatprep.subr.bf16.mxu0 0
        %1380 = vmatpush1.bf16.msra.mxu0 0
        %1381 = vmatprep.subr.bf16.mxu0 0
        %1382 = vmatpush1.bf16.msra.mxu0 0
        %1383 = vmatprep.subr.bf16.mxu0 0
        %1384 = vmatpush1.bf16.msra.mxu0 0
        %1385 = vmatprep.subr.bf16.mxu0 0
        %1386 = vmatpush1.bf16.msra.mxu0 0
        %1387 = vmatprep.subr.bf16.mxu0 0
        %1388 = vmatpush1.bf16.msra.mxu0 0
        %1389 = vmatprep.subr.bf16.mxu0 0
        %1390 = vmatpush1.bf16.msra.mxu0 0
        %1391 = vmatprep.subr.bf16.mxu0 0
        %1392 = vmatpush1.bf16.msra.mxu0 0
        %1393 = vmatprep.subr.bf16.mxu0 0
        %1394 = vmatpush1.bf16.msra.mxu0 0
        %1395 = vmatprep.subr.bf16.mxu0 0
        %1396 = vmatpush1.bf16.msra.mxu0 0
        %1397 = vmatprep.subr.bf16.mxu0 0
        %1398 = vmatpush1.bf16.msra.mxu0 0
        %1399 = vmatprep.mubr.bf16.mxu0 0
        %1400 = vmatmul.mubr.bf16.gmra.mrb[0].mxu0 %v1356
        %v1401 = vpop.f32.mrb[0].mxu0
        %v1402 = vadd.f32 %v1313, %v1401
        %v1403 = vpop.f32.mrb[0].mxu0
        %v1404 = vadd.f32 %v1313, %v1403
        %v1405 = vpop.f32.mrb[0].mxu0
        %v1406 = vpop.f32.mrb[0].mxu0
        %1407 = vdwg.mxu0
        %1408 = vmatprep.subr.bf16.mxu0 0
        %1409 = vmatpush1.bf16.msra.mxu0 %v1342
        %1410 = vmatprep.subr.bf16.mxu0 0
        %1411 = vmatpush1.bf16.msra.mxu0 %v1345
        %1412 = vmatprep.subr.bf16.mxu0 0
        %1413 = vmatpush1.bf16.msra.mxu0 %v1365
        %1414 = vmatprep.subr.bf16.mxu0 0
        %1415 = vmatpush1.bf16.msra.mxu0 0
        %1416 = vmatprep.subr.bf16.mxu0 0
        %1417 = vmatpush1.bf16.msra.mxu0 0
        %1418 = vmatprep.subr.bf16.mxu0 0
        %1419 = vmatpush1.bf16.msra.mxu0 0
        %1420 = vmatprep.subr.bf16.mxu0 0
        %1421 = vmatpush1.bf16.msra.mxu0 0
        %1422 = vmatprep.subr.bf16.mxu0 0
        %1423 = vmatpush1.bf16.msra.mxu0 0
        %1424 = vmatprep.subr.bf16.mxu0 0
        %1425 = vmatpush1.bf16.msra.mxu0 0
        %1426 = vmatprep.subr.bf16.mxu0 0
        %1427 = vmatpush1.bf16.msra.mxu0 0
        %1428 = vmatprep.subr.bf16.mxu0 0
        %1429 = vmatpush1.bf16.msra.mxu0 0
        %1430 = vmatprep.subr.bf16.mxu0 0
        %1431 = vmatpush1.bf16.msra.mxu0 0
        %1432 = vmatprep.subr.bf16.mxu0 0
        %1433 = vmatpush1.bf16.msra.mxu0 0
        %1434 = vmatprep.subr.bf16.mxu0 0
        %1435 = vmatpush1.bf16.msra.mxu0 0
        %1436 = vmatprep.subr.bf16.mxu0 0
        %1437 = vmatpush1.bf16.msra.mxu0 0
        %1438 = vmatprep.subr.bf16.mxu0 0
        %1439 = vmatpush1.bf16.msra.mxu0 0
        %1440 = vmatprep.mubr.bf16.mxu0 0
        %1441 = vmatmul.mubr.bf16.gmra.mrb[0].mxu0 %v1356
        %v1442 = vpop.f32.mrb[0].mxu0
        %v1443 = vadd.f32 %v1313, %v1442
        %v1444 = vpop.f32.mrb[0].mxu0
        %v1445 = vpop.f32.mrb[0].mxu0
        %v1446 = vpop.f32.mrb[0].mxu0
        %1447 = vdwg.mxu0
        %s1448 = scalar_lea.vmem %s229, 24 [#allocation9]
        %1449 = vst [vmem:[%s1448] sm:$0xff] %v1402
        %1450 = vst [vmem:[%s1448 + $0x8] sm:$0xff] %v1404
        %1451 = vst [vmem:[%s1448 + $0x10] sm:$0xff] %v1443
        %s1452 = sand.u32 %s119, 1
        %s1453 = scalar_lea.sflag [#allocation6], %s1452
        %s1454 = sand.u32 %s119, 1
        %s1455 = smul.addr %s1454, 48
        %s1456 = scalar_lea.vmem [#allocation9], %s1455
        // Predicated region
        $region45: #{tpu_custom_call.1} parent=35 // pred_check
          %p1457 = pneg %p129
        $region46: #{tpu_custom_call.1} parent=35 // pred_check_branch
          %1459 = sbr.rel (%p1457) target = $region48
        $region47: #{tpu_custom_call.1} parent=35 // pred_region
          %s1460 = smul.u32 2, %s22
          %s1462 = ssub.s32 768, 768
          %1463 = vsyncadd %s1453, %s1462
          %s1464 = smul.addr %s1460, 3
          %s1465 = smul.addr %s1464, 128
          %s1466 = scalar_lea.hbm %s4, %s1465
          %s1467 = sshll.u32 %s1456, 4
          %s1468 = int_to_ptr.vmem [resolvable:$true] %s1467
          %1473 = dma.vmem_to_hbm [thread:$0]  %s1468, 768, %s1466, %s1453, 384, 384, 24
        $region48: #{tpu_custom_call.1} parent=35 // pred_fallthru
          _
      $region36: #{tpu_custom_call.1} parent=5 // pred_fallthru
        _
      %p1474 = scmp.le.s32.totalorder 2, %s17
      // Predicated region
      $region49: #{tpu_custom_call.1} parent=5 // pred_check
        %p1475 = pneg %p1474
      $region50: #{tpu_custom_call.1} parent=5 // pred_check_branch
        %1477 = sbr.rel (%p1475) target = $region52
      $region51: #{tpu_custom_call.1} parent=5 // pred_region
        %s1478 = ssub.s32 %s17, 2
        // Predicated region
        $region53: #{tpu_custom_call.1} parent=51 // pred_check
          %p1479 = pneg %p135
        $region54: #{tpu_custom_call.1} parent=51 // pred_check_branch
          %1481 = sbr.rel (%p1479) target = $region56
        $region55: #{tpu_custom_call.1} parent=51 // pred_region
          %s1482 = sand.u32 %s120, 1
          %s1483 = scalar_lea.sflag [#allocation6], %s1482
          %s1484 = sand.u32 %s120, 1
          %s1485 = smul.addr %s1484, 48
          %s1486 = scalar_lea.vmem [#allocation9], %s1485
          %1487 = dma.done %s1483, 768
        $region56: #{tpu_custom_call.1} parent=51 // pred_fallthru
          _
      $region52: #{tpu_custom_call.1} parent=5 // pred_fallthru
        _
    $region6: #{tpu_custom_call.1} parent=1 // loop_footer
      %s21 = sadd.s32 1, %s17
    $region7: #{tpu_custom_call.1} parent=1 // loop_footer_branch
      %16 = sbr.rel target = $region3
    $region8: #{tpu_custom_call.1} parent=1 // loop_exit
      _
    %1488 = vsyncpa [#allocation5], 1
    %s1489 = scalar_lea.sflag [#allocation5], 1
    %1490 = vsyncpa %s1489, 1
    %1491 = vsyncpa [#allocation8], 1
    %1492 = vsyncpa [#allocation6], 1
    %s1493 = scalar_lea.sflag [#allocation6], 1
    %1494 = vsyncpa %s1493, 1

</llo_original>
